<compile_context>
chip_gen: v5e
topology: v5e:2x2
jax: 0.10.0
libtpu: 0.0.40
codegen_flags: <defaults>
</compile_context>

<pallas_src>
import math
from functools import partial

import jax
import jax.numpy as jnp
from jax import lax
from jax.experimental import pallas as pl
from jax.experimental.pallas import tpu as pltpu

SQRT_HALF = math.sqrt(0.5)


def _round_up(x, m):
    return (x + m - 1) // m * m


def _wavenet_kernel(dil_ref,                                      # scalar prefetch (SMEM)
                    x_ref, fw_ref, fb_ref, cw_ref, cb_ref, ow_ref, ob_ref,
                    l1w_ref, l1b_ref, l2w_ref, l2b_ref,           # inputs  (VMEM)
                    o_ref,                                        # output  (VMEM)
                    hist_ref, work_ref, skip_ref,                 # scratch (VMEM)
                    *, kernel_size, pad, labels, softmax, compute_dtype):
    """Grid = (batch, time_tile, layer).  One step = one residual layer on one tile."""
    t = pl.program_id(1)
    l = pl.program_id(2)
    n_layers = pl.num_programs(2)
    t_tile, c_pad = skip_ref.shape

    # -- layer 0: first 1x1 conv (labels -> C) for this time tile -------------------
    @pl.when(l == 0)
    def _():
        x = x_ref[0]                                              # (Tt, Lp)
        h0 = jnp.dot(x, fw_ref[...],
                     preferred_element_type=jnp.float32) + fb_ref[...]
        work_ref[pad:, :] = h0

    # -- first time tile: causal zero history for this layer ------------------------
    @pl.when(t == 0)
    def _():
        hist_ref[l] = jnp.zeros((pad, c_pad), jnp.float32)

    # Contiguous [history | current tile] buffer so every dilated tap is a slice.
    work_ref[0:pad, :] = hist_ref[l]
    residual = work_ref[pad:, :]                                  # (Tt, Cp), f32
    # Save this layer's input tail as the causal halo for the next time tile.
    hist_ref[l] = work_ref[t_tile:t_tile + pad, :]

    # -- fused dilated causal conv: one (Tt, k*Cp) @ (k*Cp, 2*Cp) MXU matmul --------
    dil = dil_ref[l]
    taps = []
    for j in range(kernel_size):
        start = pad - (kernel_size - 1 - j) * dil                 # causal left shift
        taps.append(work_ref[pl.ds(start, t_tile), :])
    shifted = jnp.concatenate(taps, axis=-1).astype(compute_dtype)

    y = jnp.dot(shifted, cw_ref[0],
                preferred_element_type=jnp.float32) + cb_ref[0]
    z = jnp.tanh(y[:, :c_pad]) * jax.nn.sigmoid(y[:, c_pad:])     # GLU gate, f32

    out = jnp.dot(z.astype(compute_dtype), ow_ref[0],
                  preferred_element_type=jnp.float32) + ob_ref[0]
    h_new = (out + residual) * SQRT_HALF
    work_ref[pad:, :] = h_new                                     # input to next layer

    @pl.when(l == 0)
    def _():
        skip_ref[...] = h_new

    @pl.when(l > 0)
    def _():
        skip_ref[...] = (skip_ref[...] + h_new) * SQRT_HALF

    # -- last layer: ReLU -> 1x1 (C->C) -> ReLU -> 1x1 (C->labels) ------------------
    @pl.when(l == n_layers - 1)
    def _():
        v = jnp.maximum(skip_ref[...], 0.0)
        v = jnp.dot(v.astype(compute_dtype), l1w_ref[...],
                    preferred_element_type=jnp.float32) + l1b_ref[...]
        v = jnp.maximum(v, 0.0)
        v = jnp.dot(v.astype(compute_dtype), l2w_ref[...],
                    preferred_element_type=jnp.float32) + l2b_ref[...]
        if softmax:
            lane = lax.broadcasted_iota(jnp.int32, v.shape, 1)
            v = jax.nn.softmax(jnp.where(lane < labels, v, -1e30), axis=-1)
        o_ref[0] = v.astype(o_ref.dtype)


def wavenet_forward(x_bct, params, *, layers, stacks, kernel_size, softmax=False,
                    t_tile=None, compute_dtype=jnp.bfloat16):
    """x_bct: (B, labels, T) float32 (PyTorch NCT).  Returns (B, labels, T) float32."""
    B, labels, T = x_bct.shape
    C = params["first_w"].shape[0]
    layers_per_stack = layers // stacks
    max_dilation = 2 ** (layers_per_stack - 1)
    pad = max(8, _round_up((kernel_size - 1) * max_dilation, 8))  # aligned causal halo

    c_pad = _round_up(C, 128)                                     # lane-dense channels
    l_pad = _round_up(labels, 128)

    if t_tile is None:
        t_tile = T if T <= 1024 else 1024
    assert T % t_tile == 0, "t_tile must divide T"
    assert t_tile % 8 == 0 and t_tile >= pad, "t_tile must be 8-aligned and >= causal halo"
    num_t = T // t_tile

    def pad_to(a, axis, size):
        widths = [(0, 0)] * a.ndim
        widths[axis] = (0, size - a.shape[axis])
        return jnp.pad(a, widths)

    # ---- pre-transpose + lane-pad weights once, outside the kernel ------------------
    # first_conv: Conv1d1x1(labels -> C)
    fw = pad_to(pad_to(params["first_w"].T, 0, l_pad), 1, c_pad).astype(compute_dtype)
    fb = pad_to(params["first_b"], 1, c_pad)
    # dilated conv (C -> 2C), taps fused: (L, k*Cp, 2*Cp) in (Cin, Cout) layout.
    cw = params["conv_w"]                                         # (L, k, 2C, C)

    def prep_half(w):                                             # (L, k, Cout, Cin)
        w = jnp.transpose(w, (0, 1, 3, 2))                        # -> (L, k, Cin, Cout)
        return pad_to(pad_to(w, 2, c_pad), 3, c_pad)

    cw_f = jnp.concatenate([prep_half(cw[:, :, :C, :]),
                            prep_half(cw[:, :, C:, :])], axis=-1)  # (L, k, Cp, 2Cp)
    cw_f = cw_f.reshape(layers, kernel_size * c_pad, 2 * c_pad).astype(compute_dtype)
    cb = params["conv_b"]                                          # (L, 1, 2C)
    cb_f = jnp.concatenate([pad_to(cb[:, :, :C], 2, c_pad),
                            pad_to(cb[:, :, C:], 2, c_pad)], axis=-1)
    # per-layer 1x1 out conv (C -> C)
    ow = pad_to(pad_to(jnp.transpose(params["out_w"], (0, 2, 1)), 1, c_pad),
                2, c_pad).astype(compute_dtype)
    ob = pad_to(params["out_b"], 2, c_pad)
    # last_conv_layers 1x1 convs
    l1w = pad_to(pad_to(params["last1_w"].T, 0, c_pad), 1, c_pad).astype(compute_dtype)
    l1b = pad_to(params["last1_b"], 1, c_pad)
    l2w = pad_to(pad_to(params["last2_w"].T, 0, c_pad), 1, l_pad).astype(compute_dtype)
    l2b = pad_to(params["last2_b"], 1, l_pad)

    # NCT -> NTC, lane-pad labels, narrow to the matmul input dtype.
    x_btc = pad_to(jnp.transpose(x_bct, (0, 2, 1)), 2, l_pad).astype(compute_dtype)

    # per-layer dilation table, scalar-prefetched into SMEM.
    dil = jnp.asarray([2 ** (i % layers_per_stack) for i in range(layers)], jnp.int32)

    def const_spec(a):                         # grid-invariant (small) weights
        n = a.ndim
        return pl.BlockSpec(a.shape, lambda b, t, l, d, _n=n: (0,) * _n)

    def layer_spec(a):                         # stream one layer of weights per step
        n = a.ndim
        return pl.BlockSpec((1,) + a.shape[1:],
                            lambda b, t, l, d, _n=n: (l,) + (0,) * (_n - 1))

    in_specs = [pl.BlockSpec((1, t_tile, l_pad), lambda b, t, l, d: (b, t, 0)),
                const_spec(fw), const_spec(fb),
                layer_spec(cw_f), layer_spec(cb_f),
                layer_spec(ow), layer_spec(ob),
                const_spec(l1w), const_spec(l1b),
                const_spec(l2w), const_spec(l2b)]
    out_specs = pl.BlockSpec((1, t_tile, l_pad), lambda b, t, l, d: (b, t, 0))

    kernel = partial(_wavenet_kernel, kernel_size=kernel_size, pad=pad,
                     labels=labels, softmax=softmax, compute_dtype=compute_dtype)

    out_btc = pl.pallas_call(
        kernel,
        out_shape=jax.ShapeDtypeStruct((B, T, l_pad), jnp.float32),
        grid_spec=pltpu.PrefetchScalarGridSpec(
            num_scalar_prefetch=1,
            grid=(B, num_t, layers),
            in_specs=in_specs,
            out_specs=out_specs,
            scratch_shapes=[
                pltpu.VMEM((layers, pad, c_pad), jnp.float32),    # per-layer causal halo
                pltpu.VMEM((pad + t_tile, c_pad), jnp.float32),   # [halo | tile] work buf
                pltpu.VMEM((t_tile, c_pad), jnp.float32),         # skip accumulator
            ]),
        compiler_params=pltpu.CompilerParams(
            dimension_semantics=("parallel", "arbitrary", "arbitrary"),
            vmem_limit_bytes=48 * 1024 * 1024),
    )(dil, x_btc, fw, fb, cw_f, cb_f, ow, ob, l1w, l1b, l2w, l2b)

    return jnp.transpose(out_btc[:, :, :labels], (0, 2, 1))       # back to (B, labels, T)


def init_params(key, *, labels, channels, layers, kernel_size):
    """Deterministic synthetic parameters matching the PyTorch module's shapes."""
    C = channels
    keys = jax.random.split(key, 10)

    def w(k, shape, fan_in):
        return jax.random.normal(k, shape, jnp.float32) / math.sqrt(fan_in)

    return {
        # first_conv: Conv1d1x1(labels, C)
        "first_w": w(keys[0], (C, labels), labels),
        "first_b": w(keys[1], (1, C), labels),
        # per-layer dilated conv: Conv1d(C, 2C, kernel_size), stored as (L, k, 2C, C)
        "conv_w": w(keys[2], (layers, kernel_size, 2 * C, C), C * kernel_size),
        "conv_b": w(keys[3], (layers, 1, 2 * C), C * kernel_size),
        # per-layer conv1x1_out: Conv1d1x1(C, C)
        "out_w": w(keys[4], (layers, C, C), C),
        "out_b": w(keys[5], (layers, 1, C), C),
        # last_conv_layers 1x1 convs
        "last1_w": w(keys[6], (C, C), C),
        "last1_b": w(keys[7], (1, C), C),
        "last2_w": w(keys[8], (labels, C), C),
        "last2_b": w(keys[9], (1, labels), C),
    }


def reference_forward(x_bct, params, *, layers, stacks, kernel_size, softmax=False):
    """Pure-JAX (XLA) reference that mirrors the PyTorch forward exactly."""
    B, labels, T = x_bct.shape
    C = params["first_w"].shape[0]
    layers_per_stack = layers // stacks

    def conv1x1(x, w, b):                                         # x: (B, Cin, T)
        return jnp.einsum("oc,bct->bot", w, x) + b[0][None, :, None]

    h = conv1x1(x_bct, params["first_w"], params["first_b"])
    skips = None
    for l in range(layers):
        d = 2 ** (l % layers_per_stack)
        pad = (kernel_size - 1) * d
        w_oih = jnp.transpose(params["conv_w"][l], (1, 2, 0))     # (2C, C, k)
        y = lax.conv_general_dilated(h, w_oih, window_strides=(1,),
                                     padding=[(pad, pad)], rhs_dilation=(d,),
                                     dimension_numbers=("NCH", "OIH", "NCH"))
        y = y[:, :, :T] + params["conv_b"][l, 0][None, :, None]
        a, b_gate = y[:, :C], y[:, C:]
        z = jnp.tanh(a) * jax.nn.sigmoid(b_gate)
        out = conv1x1(z, params["out_w"][l], params["out_b"][l])
        h = (out + h) * SQRT_HALF
        skips = h if skips is None else (skips + h) * SQRT_HALF

    v = jax.nn.relu(skips)
    v = conv1x1(v, params["last1_w"], params["last1_b"])
    v = jax.nn.relu(v)
    v = conv1x1(v, params["last2_w"], params["last2_b"])
    if softmax:
        v = jax.nn.softmax(v, axis=1)
    return v


if __name__ == "__main__":
    # Small-but-consistent shapes: labels=32, channels=32, layers=4, stacks=2, T=64, B=2.
    B, labels, C, layers, stacks, kernel_size, T = 2, 32, 32, 4, 2, 3, 64

    key = jax.random.PRNGKey(0)
    k_params, k_idx = jax.random.split(key)

    params = init_params(k_params, labels=labels, channels=C,
                         layers=layers, kernel_size=kernel_size)

    # One-hot encoded audio signal, shape (B x labels x T) like the PyTorch docstring.
    idx = jax.random.randint(k_idx, (B, T), 0, labels)
    x = jnp.transpose(jax.nn.one_hot(idx, labels, dtype=jnp.float32), (0, 2, 1))

    ref = jax.block_until_ready(
        reference_forward(x, params, layers=layers, stacks=stacks,
                          kernel_size=kernel_size, softmax=False))

    # f32 matmul path: strict numerical check against the XLA reference.
    out_f32 = jax.block_until_ready(
        wavenet_forward(x, params, layers=layers, stacks=stacks,
                        kernel_size=kernel_size, softmax=False,
                        t_tile=32, compute_dtype=jnp.float32))
    assert out_f32.shape == (B, labels, T)
    assert jnp.allclose(out_f32, ref, atol=2e-3, rtol=2e-3), \
        f"f32 max abs diff = {float(jnp.max(jnp.abs(out_f32 - ref)))}"

    # bf16 matmul-input path (perf config, f32 accumulation): loose check.
    out_bf16 = jax.block_until_ready(
        wavenet_forward(x, params, layers=layers, stacks=stacks,
                        kernel_size=kernel_size, softmax=False,
                        t_tile=32, compute_dtype=jnp.bfloat16))
    assert out_bf16.shape == (B, labels, T)
    assert jnp.allclose(out_bf16, ref, atol=5e-2, rtol=5e-2), \
        f"bf16 max abs diff = {float(jnp.max(jnp.abs(out_bf16 - ref)))}"

    print("KERNEL_OK")
</pallas_src>

<mosaic_0001>
module attributes {stable_mosaic.version = 11 : i64} {
  func.func @_wavenet_kernel(%arg0: i32, %arg1: i32, %arg2: i32, %arg3: memref<4xi32, #tpu.memory_space<smem>>, %arg4: memref<1x32x128xf32, #tpu.memory_space<vmem>>, %arg5: memref<128x128xf32, #tpu.memory_space<vmem>>, %arg6: memref<1x128xf32, #tpu.memory_space<vmem>>, %arg7: memref<1x384x256xf32, #tpu.memory_space<vmem>>, %arg8: memref<1x1x256xf32, #tpu.memory_space<vmem>>, %arg9: memref<1x128x128xf32, #tpu.memory_space<vmem>>, %arg10: memref<1x1x128xf32, #tpu.memory_space<vmem>>, %arg11: memref<128x128xf32, #tpu.memory_space<vmem>>, %arg12: memref<1x128xf32, #tpu.memory_space<vmem>>, %arg13: memref<128x128xf32, #tpu.memory_space<vmem>>, %arg14: memref<1x128xf32, #tpu.memory_space<vmem>>, %arg15: memref<1x32x128xf32, #tpu.memory_space<vmem>>, %arg16: memref<4x8x128xf32, #tpu.memory_space<vmem>>, %arg17: memref<40x128xf32, #tpu.memory_space<vmem>>, %arg18: memref<32x128xf32, #tpu.memory_space<vmem>>) attributes {dimension_semantics = [#tpu.dimension_semantics<parallel>, #tpu.dimension_semantics<arbitrary>, #tpu.dimension_semantics<arbitrary>], iteration_bounds = array<i64: 2, 2, 4>, scalar_prefetch = 1 : i64, scratch_operands = 3 : i64, tpu.core_type = #tpu.core_type<tc>, window_params = [{transform_indices = @transform_0, window_bounds = array<i64: 1, 32, 128>}, {pipeline_mode = #tpu.pipeline_mode<synchronous>, transform_indices = @transform_1, window_bounds = array<i64: 128, 128>}, {pipeline_mode = #tpu.pipeline_mode<synchronous>, transform_indices = @transform_2, window_bounds = array<i64: 1, 128>}, {transform_indices = @transform_3, window_bounds = array<i64: 1, 384, 256>}, {transform_indices = @transform_4, window_bounds = array<i64: 1, 1, 256>}, {transform_indices = @transform_5, window_bounds = array<i64: 1, 128, 128>}, {transform_indices = @transform_6, window_bounds = array<i64: 1, 1, 128>}, {pipeline_mode = #tpu.pipeline_mode<synchronous>, transform_indices = @transform_7, window_bounds = array<i64: 128, 128>}, {pipeline_mode = #tpu.pipeline_mode<synchronous>, transform_indices = @transform_8, window_bounds = array<i64: 1, 128>}, {pipeline_mode = #tpu.pipeline_mode<synchronous>, transform_indices = @transform_9, window_bounds = array<i64: 128, 128>}, {pipeline_mode = #tpu.pipeline_mode<synchronous>, transform_indices = @transform_10, window_bounds = array<i64: 1, 128>}, {transform_indices = @transform_11, window_bounds = array<i64: 1, 32, 128>}]} {
    %c0_i32 = arith.constant 0 : i32
    %0 = arith.cmpi eq, %arg2, %c0_i32 : i32
    %1 = arith.extui %0 : i1 to i32
    %c0_i32_0 = arith.constant 0 : i32
    %2 = arith.cmpi ne, %1, %c0_i32_0 : i32
    scf.if %2 {
      %c0_38 = arith.constant 0 : index
      %c0_39 = arith.constant 0 : index
      %c0_40 = arith.constant 0 : index
      %67 = vector.load %arg4[%c0_38, %c0_39, %c0_40] : memref<1x32x128xf32, #tpu.memory_space<vmem>>, vector<1x32x128xf32>
      %68 = vector.shape_cast %67 : vector<1x32x128xf32> to vector<32x128xf32>
      %c0_41 = arith.constant 0 : index
      %c0_42 = arith.constant 0 : index
      %69 = vector.load %arg5[%c0_41, %c0_42] : memref<128x128xf32, #tpu.memory_space<vmem>>, vector<128x128xf32>
      %cst_43 = arith.constant dense<0.000000e+00> : vector<32x128xf32>
      %70 = tpu.matmul %68, %69, %cst_43 {dimension_numbers = #tpu.dot_dimension_numbers<[1], [0], [0], [1], [0, 0, 1, 1], [], []>} : vector<32x128xf32>, vector<128x128xf32>, vector<32x128xf32> -> vector<32x128xf32>
      %c0_44 = arith.constant 0 : index
      %c0_45 = arith.constant 0 : index
      %71 = vector.load %arg6[%c0_44, %c0_45] : memref<1x128xf32, #tpu.memory_space<vmem>>, vector<1x128xf32>
      %72 = vector.broadcast %71 : vector<1x128xf32> to vector<32x128xf32>
      %73 = arith.addf %70, %72 : vector<32x128xf32>
      %c8_46 = arith.constant 8 : index
      %c0_47 = arith.constant 0 : index
      %74 = vector.load %arg17[%c8_46, %c0_47] : memref<40x128xf32, #tpu.memory_space<vmem>>, vector<32x128xf32>
      tpu.vector_store %arg17[%c8_46, %c0_47], %73 {strides = array<i32>} : memref<40x128xf32, #tpu.memory_space<vmem>>, vector<32x128xf32>,
    } else {
    }
    %c0_i32_1 = arith.constant 0 : i32
    %3 = arith.cmpi eq, %arg1, %c0_i32_1 : i32
    %4 = arith.extui %3 : i1 to i32
    %c0_i32_2 = arith.constant 0 : i32
    %5 = arith.cmpi ne, %4, %c0_i32_2 : i32
    scf.if %5 {
      %cst_38 = arith.constant 0.000000e+00 : f32
      %67 = vector.broadcast %cst_38 : f32 to vector<8x128xf32>
      %68 = arith.index_cast %arg2 : i32 to index
      %c0_39 = arith.constant 0 : index
      %c0_40 = arith.constant 0 : index
      %69 = vector.load %arg16[%68, %c0_39, %c0_40] : memref<4x8x128xf32, #tpu.memory_space<vmem>>, vector<1x8x128xf32>
      %70 = vector.shape_cast %69 : vector<1x8x128xf32> to vector<8x128xf32>
      %71 = vector.shape_cast %67 : vector<8x128xf32> to vector<1x8x128xf32>
      tpu.vector_store %arg16[%68, %c0_39, %c0_40], %71 {strides = array<i32>} : memref<4x8x128xf32, #tpu.memory_space<vmem>>, vector<1x8x128xf32>,
    } else {
    }
    %6 = arith.index_cast %arg2 : i32 to index
    %c0 = arith.constant 0 : index
    %c0_3 = arith.constant 0 : index
    %7 = vector.load %arg16[%6, %c0, %c0_3] : memref<4x8x128xf32, #tpu.memory_space<vmem>>, vector<1x8x128xf32>
    %8 = vector.shape_cast %7 : vector<1x8x128xf32> to vector<8x128xf32>
    %c0_4 = arith.constant 0 : index
    %c0_5 = arith.constant 0 : index
    %9 = vector.load %arg17[%c0_4, %c0_5] : memref<40x128xf32, #tpu.memory_space<vmem>>, vector<8x128xf32>
    tpu.vector_store %arg17[%c0_4, %c0_5], %8 {strides = array<i32>} : memref<40x128xf32, #tpu.memory_space<vmem>>, vector<8x128xf32>,
    %c8 = arith.constant 8 : index
    %c0_6 = arith.constant 0 : index
    %10 = vector.load %arg17[%c8, %c0_6] : memref<40x128xf32, #tpu.memory_space<vmem>>, vector<32x128xf32>
    %c32 = arith.constant 32 : index
    %c0_7 = arith.constant 0 : index
    %11 = vector.load %arg17[%c32, %c0_7] : memref<40x128xf32, #tpu.memory_space<vmem>>, vector<8x128xf32>
    %12 = arith.index_cast %arg2 : i32 to index
    %c0_8 = arith.constant 0 : index
    %c0_9 = arith.constant 0 : index
    %13 = vector.load %arg16[%12, %c0_8, %c0_9] : memref<4x8x128xf32, #tpu.memory_space<vmem>>, vector<1x8x128xf32>
    %14 = vector.shape_cast %13 : vector<1x8x128xf32> to vector<8x128xf32>
    %15 = vector.shape_cast %11 : vector<8x128xf32> to vector<1x8x128xf32>
    tpu.vector_store %arg16[%12, %c0_8, %c0_9], %15 {strides = array<i32>} : memref<4x8x128xf32, #tpu.memory_space<vmem>>, vector<1x8x128xf32>,
    %16 = arith.index_cast %arg2 : i32 to index
    %17 = memref.load %arg3[%16] : memref<4xi32, #tpu.memory_space<smem>>
    %c2_i32 = arith.constant 2 : i32
    %18 = arith.muli %c2_i32, %17 : i32
    %c8_i32 = arith.constant 8 : i32
    %19 = arith.subi %c8_i32, %18 : i32
    %20 = arith.index_cast %19 : i32 to index
    %c0_10 = arith.constant 0 : index
    %21 = vector.load %arg17[%20, %c0_10] : memref<40x128xf32, #tpu.memory_space<vmem>>, vector<32x128xf32>
    %c1_i32 = arith.constant 1 : i32
    %22 = arith.muli %c1_i32, %17 : i32
    %c8_i32_11 = arith.constant 8 : i32
    %23 = arith.subi %c8_i32_11, %22 : i32
    %24 = arith.index_cast %23 : i32 to index
    %c0_12 = arith.constant 0 : index
    %25 = vector.load %arg17[%24, %c0_12] : memref<40x128xf32, #tpu.memory_space<vmem>>, vector<32x128xf32>
    %c0_i32_13 = arith.constant 0 : i32
    %26 = arith.muli %c0_i32_13, %17 : i32
    %c8_i32_14 = arith.constant 8 : i32
    %27 = arith.subi %c8_i32_14, %26 : i32
    %28 = arith.index_cast %27 : i32 to index
    %c0_15 = arith.constant 0 : index
    %29 = vector.load %arg17[%28, %c0_15] : memref<40x128xf32, #tpu.memory_space<vmem>>, vector<32x128xf32>
    %30 = tpu.concatenate %21, %25, %29 in 1 : vector<32x128xf32>, vector<32x128xf32>, vector<32x128xf32> -> vector<32x384xf32>
    %c0_16 = arith.constant 0 : index
    %c0_17 = arith.constant 0 : index
    %c0_18 = arith.constant 0 : index
    %31 = vector.load %arg7[%c0_16, %c0_17, %c0_18] : memref<1x384x256xf32, #tpu.memory_space<vmem>>, vector<1x384x256xf32>
    %32 = vector.shape_cast %31 : vector<1x384x256xf32> to vector<384x256xf32>
    %cst = arith.constant dense<0.000000e+00> : vector<32x256xf32>
    %33 = tpu.matmul %30, %32, %cst {dimension_numbers = #tpu.dot_dimension_numbers<[1], [0], [0], [1], [0, 0, 1, 1], [], []>} : vector<32x384xf32>, vector<384x256xf32>, vector<32x256xf32> -> vector<32x256xf32>
    %c0_19 = arith.constant 0 : index
    %c0_20 = arith.constant 0 : index
    %c0_21 = arith.constant 0 : index
    %34 = vector.load %arg8[%c0_19, %c0_20, %c0_21] : memref<1x1x256xf32, #tpu.memory_space<vmem>>, vector<1x1x256xf32>
    %35 = vector.shape_cast %34 : vector<1x1x256xf32> to vector<1x256xf32>
    %36 = vector.broadcast %35 : vector<1x256xf32> to vector<32x256xf32>
    %37 = arith.addf %33, %36 : vector<32x256xf32>
    %38 = vector.extract_strided_slice %37 {offsets = [0, 0], sizes = [32, 128], strides = [1, 1]} : vector<32x256xf32> to vector<32x128xf32>
    %39 = math.tanh %38 : vector<32x128xf32>
    %40 = vector.extract_strided_slice %37 {offsets = [0, 128], sizes = [32, 128], strides = [1, 1]} : vector<32x256xf32> to vector<32x128xf32>
    %41 = arith.negf %40 : vector<32x128xf32>
    %42 = math.exp %41 : vector<32x128xf32>
    %cst_22 = arith.constant 1.000000e+00 : f32
    %43 = vector.broadcast %cst_22 : f32 to vector<32x128xf32>
    %44 = arith.addf %43, %42 : vector<32x128xf32>
    %45 = arith.divf %43, %44 : vector<32x128xf32>
    %46 = arith.mulf %39, %45 : vector<32x128xf32>
    %c0_23 = arith.constant 0 : index
    %c0_24 = arith.constant 0 : index
    %c0_25 = arith.constant 0 : index
    %47 = vector.load %arg9[%c0_23, %c0_24, %c0_25] : memref<1x128x128xf32, #tpu.memory_space<vmem>>, vector<1x128x128xf32>
    %48 = vector.shape_cast %47 : vector<1x128x128xf32> to vector<128x128xf32>
    %cst_26 = arith.constant dense<0.000000e+00> : vector<32x128xf32>
    %49 = tpu.matmul %46, %48, %cst_26 {dimension_numbers = #tpu.dot_dimension_numbers<[1], [0], [0], [1], [0, 0, 1, 1], [], []>} : vector<32x128xf32>, vector<128x128xf32>, vector<32x128xf32> -> vector<32x128xf32>
    %c0_27 = arith.constant 0 : index
    %c0_28 = arith.constant 0 : index
    %c0_29 = arith.constant 0 : index
    %50 = vector.load %arg10[%c0_27, %c0_28, %c0_29] : memref<1x1x128xf32, #tpu.memory_space<vmem>>, vector<1x1x128xf32>
    %51 = vector.shape_cast %50 : vector<1x1x128xf32> to vector<1x128xf32>
    %52 = vector.broadcast %51 : vector<1x128xf32> to vector<32x128xf32>
    %53 = arith.addf %49, %52 : vector<32x128xf32>
    %54 = arith.addf %53, %10 : vector<32x128xf32>
    %cst_30 = arith.constant 0.707106769 : f32
    %55 = vector.broadcast %cst_30 : f32 to vector<32x128xf32>
    %56 = arith.mulf %54, %55 : vector<32x128xf32>
    %c8_31 = arith.constant 8 : index
    %c0_32 = arith.constant 0 : index
    %57 = vector.load %arg17[%c8_31, %c0_32] : memref<40x128xf32, #tpu.memory_space<vmem>>, vector<32x128xf32>
    tpu.vector_store %arg17[%c8_31, %c0_32], %56 {strides = array<i32>} : memref<40x128xf32, #tpu.memory_space<vmem>>, vector<32x128xf32>,
    %c0_i32_33 = arith.constant 0 : i32
    %58 = arith.cmpi eq, %arg2, %c0_i32_33 : i32
    %59 = arith.extui %58 : i1 to i32
    %c0_i32_34 = arith.constant 0 : i32
    %60 = arith.cmpi ne, %59, %c0_i32_34 : i32
    scf.if %60 {
      %c0_38 = arith.constant 0 : index
      %c0_39 = arith.constant 0 : index
      %67 = vector.load %arg18[%c0_38, %c0_39] : memref<32x128xf32, #tpu.memory_space<vmem>>, vector<32x128xf32>
      tpu.vector_store %arg18[%c0_38, %c0_39], %56 {strides = array<i32>} : memref<32x128xf32, #tpu.memory_space<vmem>>, vector<32x128xf32>,
    } else {
    }
    %c0_i32_35 = arith.constant 0 : i32
    %61 = arith.cmpi sgt, %arg2, %c0_i32_35 : i32
    %62 = arith.extui %61 : i1 to i32
    %c0_i32_36 = arith.constant 0 : i32
    %63 = arith.cmpi ne, %62, %c0_i32_36 : i32
    scf.if %63 {
      %c0_38 = arith.constant 0 : index
      %c0_39 = arith.constant 0 : index
      %67 = vector.load %arg18[%c0_38, %c0_39] : memref<32x128xf32, #tpu.memory_space<vmem>>, vector<32x128xf32>
      %68 = arith.addf %67, %56 : vector<32x128xf32>
      %cst_40 = arith.constant 0.707106769 : f32
      %69 = vector.broadcast %cst_40 : f32 to vector<32x128xf32>
      %70 = arith.mulf %68, %69 : vector<32x128xf32>
      %c0_41 = arith.constant 0 : index
      %c0_42 = arith.constant 0 : index
      %71 = vector.load %arg18[%c0_41, %c0_42] : memref<32x128xf32, #tpu.memory_space<vmem>>, vector<32x128xf32>
      tpu.vector_store %arg18[%c0_41, %c0_42], %70 {strides = array<i32>} : memref<32x128xf32, #tpu.memory_space<vmem>>, vector<32x128xf32>,
    } else {
    }
    %c3_i32 = arith.constant 3 : i32
    %64 = arith.cmpi eq, %arg2, %c3_i32 : i32
    %65 = arith.extui %64 : i1 to i32
    %c0_i32_37 = arith.constant 0 : i32
    %66 = arith.cmpi ne, %65, %c0_i32_37 : i32
    scf.if %66 {
      %c0_38 = arith.constant 0 : index
      %c0_39 = arith.constant 0 : index
      %67 = vector.load %arg18[%c0_38, %c0_39] : memref<32x128xf32, #tpu.memory_space<vmem>>, vector<32x128xf32>
      %cst_40 = arith.constant 0.000000e+00 : f32
      %68 = vector.broadcast %cst_40 : f32 to vector<32x128xf32>
      %69 = arith.maximumf %67, %68 : vector<32x128xf32>
      %c0_41 = arith.constant 0 : index
      %c0_42 = arith.constant 0 : index
      %70 = vector.load %arg11[%c0_41, %c0_42] : memref<128x128xf32, #tpu.memory_space<vmem>>, vector<128x128xf32>
      %cst_43 = arith.constant dense<0.000000e+00> : vector<32x128xf32>
      %71 = tpu.matmul %69, %70, %cst_43 {dimension_numbers = #tpu.dot_dimension_numbers<[1], [0], [0], [1], [0, 0, 1, 1], [], []>} : vector<32x128xf32>, vector<128x128xf32>, vector<32x128xf32> -> vector<32x128xf32>
      %c0_44 = arith.constant 0 : index
      %c0_45 = arith.constant 0 : index
      %72 = vector.load %arg12[%c0_44, %c0_45] : memref<1x128xf32, #tpu.memory_space<vmem>>, vector<1x128xf32>
      %73 = vector.broadcast %72 : vector<1x128xf32> to vector<32x128xf32>
      %74 = arith.addf %71, %73 : vector<32x128xf32>
      %cst_46 = arith.constant 0.000000e+00 : f32
      %75 = vector.broadcast %cst_46 : f32 to vector<32x128xf32>
      %76 = arith.maximumf %74, %75 : vector<32x128xf32>
      %c0_47 = arith.constant 0 : index
      %c0_48 = arith.constant 0 : index
      %77 = vector.load %arg13[%c0_47, %c0_48] : memref<128x128xf32, #tpu.memory_space<vmem>>, vector<128x128xf32>
      %cst_49 = arith.constant dense<0.000000e+00> : vector<32x128xf32>
      %78 = tpu.matmul %76, %77, %cst_49 {dimension_numbers = #tpu.dot_dimension_numbers<[1], [0], [0], [1], [0, 0, 1, 1], [], []>} : vector<32x128xf32>, vector<128x128xf32>, vector<32x128xf32> -> vector<32x128xf32>
      %c0_50 = arith.constant 0 : index
      %c0_51 = arith.constant 0 : index
      %79 = vector.load %arg14[%c0_50, %c0_51] : memref<1x128xf32, #tpu.memory_space<vmem>>, vector<1x128xf32>
      %80 = vector.broadcast %79 : vector<1x128xf32> to vector<32x128xf32>
      %81 = arith.addf %78, %80 : vector<32x128xf32>
      %c0_52 = arith.constant 0 : index
      %c0_53 = arith.constant 0 : index
      %c0_54 = arith.constant 0 : index
      %82 = vector.load %arg15[%c0_52, %c0_53, %c0_54] : memref<1x32x128xf32, #tpu.memory_space<vmem>>, vector<1x32x128xf32>
      %83 = vector.shape_cast %82 : vector<1x32x128xf32> to vector<32x128xf32>
      %84 = vector.shape_cast %81 : vector<32x128xf32> to vector<1x32x128xf32>
      tpu.vector_store %arg15[%c0_52, %c0_53, %c0_54], %84 {strides = array<i32>} : memref<1x32x128xf32, #tpu.memory_space<vmem>>, vector<1x32x128xf32>,
    } else {
    }
    return
  }
  func.func @transform_0(%arg0: i32, %arg1: i32, %arg2: i32, %arg3: memref<4xi32, #tpu.memory_space<smem>>) -> (i32, i32, i32) {
    %c0_i32 = arith.constant 0 : i32
    %c0_i32_0 = arith.constant 0 : i32
    return %arg0, %arg1, %c0_i32 : i32, i32, i32
  }
  func.func @transform_1(%arg0: i32, %arg1: i32, %arg2: i32, %arg3: memref<4xi32, #tpu.memory_space<smem>>) -> (i32, i32) {
    %c0_i32 = arith.constant 0 : i32
    %c0_i32_0 = arith.constant 0 : i32
    %c0_i32_1 = arith.constant 0 : i32
    return %c0_i32, %c0_i32_0 : i32, i32
  }
  func.func @transform_2(%arg0: i32, %arg1: i32, %arg2: i32, %arg3: memref<4xi32, #tpu.memory_space<smem>>) -> (i32, i32) {
    %c0_i32 = arith.constant 0 : i32
    %c0_i32_0 = arith.constant 0 : i32
    %c0_i32_1 = arith.constant 0 : i32
    return %c0_i32, %c0_i32_0 : i32, i32
  }
  func.func @transform_3(%arg0: i32, %arg1: i32, %arg2: i32, %arg3: memref<4xi32, #tpu.memory_space<smem>>) -> (i32, i32, i32) {
    %c0_i32 = arith.constant 0 : i32
    %c0_i32_0 = arith.constant 0 : i32
    %c0_i32_1 = arith.constant 0 : i32
    return %arg2, %c0_i32, %c0_i32_0 : i32, i32, i32
  }
  func.func @transform_4(%arg0: i32, %arg1: i32, %arg2: i32, %arg3: memref<4xi32, #tpu.memory_space<smem>>) -> (i32, i32, i32) {
    %c0_i32 = arith.constant 0 : i32
    %c0_i32_0 = arith.constant 0 : i32
    %c0_i32_1 = arith.constant 0 : i32
    return %arg2, %c0_i32, %c0_i32_0 : i32, i32, i32
  }
  func.func @transform_5(%arg0: i32, %arg1: i32, %arg2: i32, %arg3: memref<4xi32, #tpu.memory_space<smem>>) -> (i32, i32, i32) {
    %c0_i32 = arith.constant 0 : i32
    %c0_i32_0 = arith.constant 0 : i32
    %c0_i32_1 = arith.constant 0 : i32
    return %arg2, %c0_i32, %c0_i32_0 : i32, i32, i32
  }
  func.func @transform_6(%arg0: i32, %arg1: i32, %arg2: i32, %arg3: memref<4xi32, #tpu.memory_space<smem>>) -> (i32, i32, i32) {
    %c0_i32 = arith.constant 0 : i32
    %c0_i32_0 = arith.constant 0 : i32
    %c0_i32_1 = arith.constant 0 : i32
    return %arg2, %c0_i32, %c0_i32_0 : i32, i32, i32
  }
  func.func @transform_7(%arg0: i32, %arg1: i32, %arg2: i32, %arg3: memref<4xi32, #tpu.memory_space<smem>>) -> (i32, i32) {
    %c0_i32 = arith.constant 0 : i32
    %c0_i32_0 = arith.constant 0 : i32
    %c0_i32_1 = arith.constant 0 : i32
    return %c0_i32, %c0_i32_0 : i32, i32
  }
  func.func @transform_8(%arg0: i32, %arg1: i32, %arg2: i32, %arg3: memref<4xi32, #tpu.memory_space<smem>>) -> (i32, i32) {
    %c0_i32 = arith.constant 0 : i32
    %c0_i32_0 = arith.constant 0 : i32
    %c0_i32_1 = arith.constant 0 : i32
    return %c0_i32, %c0_i32_0 : i32, i32
  }
  func.func @transform_9(%arg0: i32, %arg1: i32, %arg2: i32, %arg3: memref<4xi32, #tpu.memory_space<smem>>) -> (i32, i32) {
    %c0_i32 = arith.constant 0 : i32
    %c0_i32_0 = arith.constant 0 : i32
    %c0_i32_1 = arith.constant 0 : i32
    return %c0_i32, %c0_i32_0 : i32, i32
  }
  func.func @transform_10(%arg0: i32, %arg1: i32, %arg2: i32, %arg3: memref<4xi32, #tpu.memory_space<smem>>) -> (i32, i32) {
    %c0_i32 = arith.constant 0 : i32
    %c0_i32_0 = arith.constant 0 : i32
    %c0_i32_1 = arith.constant 0 : i32
    return %c0_i32, %c0_i32_0 : i32, i32
  }
  func.func @transform_11(%arg0: i32, %arg1: i32, %arg2: i32, %arg3: memref<4xi32, #tpu.memory_space<smem>>) -> (i32, i32, i32) {
    %c0_i32 = arith.constant 0 : i32
    %c0_i32_0 = arith.constant 0 : i32
    return %arg0, %arg1, %c0_i32 : i32, i32, i32
  }
}

</mosaic_0001>

<llo_original>
// kernel: tpu_custom_call.1
$region0: #{tpu_custom_call.1}
  #allocation0 [shape = 'u32[]', space=smem, size = 0x4, offset = 0x4, fixed_abs, tag = 'smem constant byte address 0x4 - core index']
  #allocation1 [shape = 'u32[72,128]{1,0:T(1,128)}', space=vmem, size = 0x9000, scoped, tag = 'internal scratch']
  #allocation2 [shape = 'f32[4,8,128]{2,1,0:T(8,128)}', space=vmem, size = 0x4000, scoped, tag = 'scratch operand']
  #allocation3 [shape = 'f32[40,128]{1,0:T(8,128)}', space=vmem, size = 0x5000, scoped, tag = 'scratch operand']
  #allocation4 [shape = 'f32[32,128]{1,0:T(8,128)}', space=vmem, size = 0x4000, scoped, tag = 'scratch operand']
  #allocation5 [shape = 's32[1]{0}', space=sflag, size = 0x4, scoped, tag = 'scoped memory for tpu_custom_call.1']
  #allocation6 [shape = 'u8[512]{0}', space=smem, size = 0x200, scoped, tag = 'prefetched SMEM operand 0']
  %s0 = inlined_call_operand.hbm [shape: s32[4], index: 0, kind: input, shape index: {}]
  %s1 = inlined_call_operand.hbm [shape: f32[2,64,128], index: 1, kind: input, shape index: {}]
  %s2 = inlined_call_operand.hbm [shape: f32[128,128], index: 2, kind: input, shape index: {}]
  %s3 = inlined_call_operand.hbm [shape: f32[1,128], index: 3, kind: input, shape index: {}]
  %s4 = inlined_call_operand.hbm [shape: f32[4,384,256], index: 4, kind: input, shape index: {}]
  %s5 = inlined_call_operand.hbm [shape: f32[4,1,256], index: 5, kind: input, shape index: {}]
  %s6 = inlined_call_operand.hbm [shape: f32[4,128,128], index: 6, kind: input, shape index: {}]
  %s7 = inlined_call_operand.hbm [shape: f32[4,1,128], index: 7, kind: input, shape index: {}]
  %s8 = inlined_call_operand.hbm [shape: f32[128,128], index: 8, kind: input, shape index: {}]
  %s9 = inlined_call_operand.hbm [shape: f32[1,128], index: 9, kind: input, shape index: {}]
  %s10 = inlined_call_operand.hbm [shape: f32[128,128], index: 10, kind: input, shape index: {}]
  %s11 = inlined_call_operand.hbm [shape: f32[1,128], index: 11, kind: input, shape index: {}]
  %s12 = inlined_call_operand.hbm [shape: f32[2,64,128], index: 12, kind: output, shape index: {}]
  %s13 = sld [smem:[#allocation0]]
  $region141: #{tpu_custom_call.1} parent=0
    _
  %s15 = ssub.s32 1, %s13
  %s16 = scalar_select 0, %s15, %s13
  %s18 = sshll.u32 %s0, 4
  %s19 = int_to_ptr.hbm [resolvable:$true] %s18
  %21 = dma.hbm_to_smem %s19, 16, [#allocation6], [#allocation5]
  %23 = dma.done [#allocation5], 16
  %24 = sfence
  $region1: #{tpu_custom_call.1} parent=0
    #allocation7 [shape = 'u8[32768]{0}', space=vmem, size = 0x8000, scoped, tag = 'input window, operand 1']
    #allocation8 [shape = 's32[2]{0}', space=sflag, size = 0x8, scoped, tag = 'scoped memory for tpu_custom_call.1']
    #allocation9 [shape = 's32[2]{0}', space=sflag, size = 0x8, scoped, tag = 'scoped memory for tpu_custom_call.1']
    #allocation10 [shape = 'u8[65536]{0}', space=vmem, size = 0x10000, scoped, tag = 'input window, operand 2, single buffered']
    #allocation11 [shape = 's32[1]{0}', space=sflag, size = 0x4, scoped, tag = 'scoped memory for tpu_custom_call.1']
    #allocation12 [shape = 'u8[512]{0}', space=vmem, size = 0x400, scoped, tag = 'input window, operand 3, single buffered']
    #allocation13 [shape = 'u8[786432]{0}', space=vmem, size = 0xc0000, scoped, tag = 'input window, operand 4']
    #allocation14 [shape = 's32[2]{0}', space=sflag, size = 0x8, scoped, tag = 'scoped memory for tpu_custom_call.1']
    #allocation15 [shape = 'u8[2048]{0}', space=vmem, size = 0x800, scoped, tag = 'input window, operand 5']
    #allocation16 [shape = 'u8[131072]{0}', space=vmem, size = 0x20000, scoped, tag = 'input window, operand 6']
    #allocation17 [shape = 's32[2]{0}', space=sflag, size = 0x8, scoped, tag = 'scoped memory for tpu_custom_call.1']
    #allocation18 [shape = 'u8[1024]{0}', space=vmem, size = 0x400, scoped, tag = 'input window, operand 7']
    #allocation19 [shape = 'u8[65536]{0}', space=vmem, size = 0x10000, scoped, tag = 'input window, operand 8, single buffered']
    #allocation20 [shape = 's32[1]{0}', space=sflag, size = 0x4, scoped, tag = 'scoped memory for tpu_custom_call.1']
    #allocation21 [shape = 'u8[512]{0}', space=vmem, size = 0x400, scoped, tag = 'input window, operand 9, single buffered']
    #allocation22 [shape = 'u8[65536]{0}', space=vmem, size = 0x10000, scoped, tag = 'input window, operand 10, single buffered']
    #allocation23 [shape = 's32[1]{0}', space=sflag, size = 0x4, scoped, tag = 'scoped memory for tpu_custom_call.1']
    #allocation24 [shape = 'u8[512]{0}', space=vmem, size = 0x400, scoped, tag = 'input window, operand 11, single buffered']
    #allocation25 [shape = 'u8[32768]{0}', space=vmem, size = 0x8000, scoped, tag = 'output window, operand 0']
    %25 = vsyncpa [#allocation8], 0
    %s26 = scalar_lea.sflag [#allocation8], 1
    %27 = vsyncpa %s26, 0
    %28 = vsyncpa [#allocation11], 0
    %29 = vsyncpa [#allocation14], 0
    %s30 = scalar_lea.sflag [#allocation14], 1
    %31 = vsyncpa %s30, 0
    %32 = vsyncpa [#allocation17], 0
    %s33 = scalar_lea.sflag [#allocation17], 1
    %34 = vsyncpa %s33, 0
    %35 = vsyncpa [#allocation20], 0
    %36 = vsyncpa [#allocation23], 0
    %37 = vsyncpa [#allocation9], 0
    %s38 = scalar_lea.sflag [#allocation9], 1
    %39 = vsyncpa %s38, 0
    loop: start=0, step=1, limit=18
    $region2: #{tpu_custom_call.1} parent=1 // loop_pre_header
      _
    $region3: #{tpu_custom_call.1} parent=1 // loop_header
      %s41 = sphi 0, %s45
      %p42 = scmp.ge.s32.totalorder %s41, 18
      %s48 = sphi 0, %s67
      %s49 = sphi 0, %s63
      %s50 = sphi 0, %s59
      %s51 = sphi 0, %s48
      %s52 = sphi 0, %s49
      %s53 = sphi 0, %s50
      %s54 = sphi 0, %s51
      %s55 = sphi 0, %s52
      %s56 = sphi 0, %s53
      %s72 = sphi 0, %s74
      %s75 = sphi 0, %s72
      %s76 = sphi 0, %s75
      %s92 = sphi 0, %s76
      %s96 = sphi 0, %s96
      %s98 = sphi 0, %s96
      %s99 = sphi 0, %s98
      %s113 = sphi 0, %s99
      %s117 = sphi 0, %s117
      %s119 = sphi 0, %s117
      %s120 = sphi 0, %s119
      %s134 = sphi 0, %s120
      %s140 = sphi 0, %s142
      %s143 = sphi 0, %s140
      %s144 = sphi 0, %s143
      %s160 = sphi 0, %s144
      %s166 = sphi 0, %s168
      %s169 = sphi 0, %s166
      %s170 = sphi 0, %s169
      %s186 = sphi 0, %s170
      %s192 = sphi 0, %s194
      %s195 = sphi 0, %s192
      %s196 = sphi 0, %s195
      %s212 = sphi 0, %s196
      %s218 = sphi 0, %s220
      %s221 = sphi 0, %s218
      %s222 = sphi 0, %s221
      %s238 = sphi 0, %s222
      %s242 = sphi 0, %s242
      %s244 = sphi 0, %s242
      %s245 = sphi 0, %s244
      %s259 = sphi 0, %s245
      %s263 = sphi 0, %s263
      %s265 = sphi 0, %s263
      %s266 = sphi 0, %s265
      %s280 = sphi 0, %s266
      %s284 = sphi 0, %s284
      %s286 = sphi 0, %s284
      %s287 = sphi 0, %s286
      %s301 = sphi 0, %s287
      %s305 = sphi 0, %s305
      %s307 = sphi 0, %s305
      %s308 = sphi 0, %s307
      %s322 = sphi 0, %s308
      %s330 = sphi 0, %s332
      %s333 = sphi 0, %s330
      %s334 = sphi 0, %s333
      %s350 = sphi 0, %s334
    $region4: #{tpu_custom_call.1} parent=1 // loop_header_branch
      %44 = sbr.rel (%p42) target = $region8
    $region5: #{tpu_custom_call.1} parent=1 // loop_body
      %s46 = ssub.s32 %s41, 1
      %s47 = ssub.s32 %s41, 2
      %s57 = sadd.s32 1, %s50
      %p58 = scmp.ge.s32.totalorder %s57, 4
      %s59 = scalar_select %p58, 0, %s57
      %s60 = sadd.s32 1, %s49
      %s61 = scalar_select %p58, %s60, %s49
      %p62 = scmp.ge.s32.totalorder %s61, 2
      %s63 = scalar_select %p62, 0, %s61
      %s64 = sadd.s32 1, %s48
      %s65 = scalar_select %p62, %s64, %s48
      %p66 = scmp.ge.s32.totalorder %s65, 2
      %s67 = scalar_select %p66, 0, %s65
      %s68 = ssub.s32 %s48, %s67
      %s69 = ssub.s32 %s49, %s63
      %s70 = sor.u32 %s68, %s69
      %p71 = scmp.eq.s32.totalorder %s70, 0
      %s73 = sadd.s32 %s72, 1
      %s74 = scalar_select %p71, %s72, %s73
      %p77 = pneg %p71
      %p78 = scmp.eq.s32.totalorder %s41, 15
      %p79 = por %p77, %p78
      %p80 = scmp.ne.s32.totalorder %s72, %s75
      %p81 = scmp.eq.s32.totalorder %s41, 0
      %p82 = por %p80, %p81
      %p83 = scmp.ne.s32.totalorder %s72, %s75
      %p84 = scmp.eq.s32.totalorder %s46, 15
      %p85 = por %p83, %p84
      %p86 = scmp.ne.s32.totalorder %s75, %s76
      %p87 = scmp.eq.s32.totalorder %s46, 0
      %p88 = por %p86, %p87
      %p89 = scmp.ne.s32.totalorder %s75, %s76
      %p90 = scmp.eq.s32.totalorder %s47, 15
      %p91 = por %p89, %p90
      %p93 = scmp.ne.s32.totalorder %s76, %s92
      %p94 = scmp.eq.s32.totalorder %s47, 0
      %p95 = por %p93, %p94
      %s97 = sadd.s32 %s96, 1
      %p100 = scmp.eq.s32.totalorder %s41, 15
      %p101 = scmp.ne.s32.totalorder %s96, %s98
      %p102 = scmp.eq.s32.totalorder %s41, 0
      %p103 = por %p101, %p102
      %p104 = scmp.ne.s32.totalorder %s96, %s98
      %p105 = scmp.eq.s32.totalorder %s46, 15
      %p106 = por %p104, %p105
      %p107 = scmp.ne.s32.totalorder %s98, %s99
      %p108 = scmp.eq.s32.totalorder %s46, 0
      %p109 = por %p107, %p108
      %p110 = scmp.ne.s32.totalorder %s98, %s99
      %p111 = scmp.eq.s32.totalorder %s47, 15
      %p112 = por %p110, %p111
      %p114 = scmp.ne.s32.totalorder %s99, %s113
      %p115 = scmp.eq.s32.totalorder %s47, 0
      %p116 = por %p114, %p115
      %s118 = sadd.s32 %s117, 1
      %p121 = scmp.eq.s32.totalorder %s41, 15
      %p122 = scmp.ne.s32.totalorder %s117, %s119
      %p123 = scmp.eq.s32.totalorder %s41, 0
      %p124 = por %p122, %p123
      %p125 = scmp.ne.s32.totalorder %s117, %s119
      %p126 = scmp.eq.s32.totalorder %s46, 15
      %p127 = por %p125, %p126
      %p128 = scmp.ne.s32.totalorder %s119, %s120
      %p129 = scmp.eq.s32.totalorder %s46, 0
      %p130 = por %p128, %p129
      %p131 = scmp.ne.s32.totalorder %s119, %s120
      %p132 = scmp.eq.s32.totalorder %s47, 15
      %p133 = por %p131, %p132
      %p135 = scmp.ne.s32.totalorder %s120, %s134
      %p136 = scmp.eq.s32.totalorder %s47, 0
      %p137 = por %p135, %p136
      %s138 = ssub.s32 %s50, %s59
      %p139 = scmp.eq.s32.totalorder %s138, 0
      %s141 = sadd.s32 %s140, 1
      %s142 = scalar_select %p139, %s140, %s141
      %p145 = pneg %p139
      %p146 = scmp.eq.s32.totalorder %s41, 15
      %p147 = por %p145, %p146
      %p148 = scmp.ne.s32.totalorder %s140, %s143
      %p149 = scmp.eq.s32.totalorder %s41, 0
      %p150 = por %p148, %p149
      %p151 = scmp.ne.s32.totalorder %s140, %s143
      %p152 = scmp.eq.s32.totalorder %s46, 15
      %p153 = por %p151, %p152
      %p154 = scmp.ne.s32.totalorder %s143, %s144
      %p155 = scmp.eq.s32.totalorder %s46, 0
      %p156 = por %p154, %p155
      %p157 = scmp.ne.s32.totalorder %s143, %s144
      %p158 = scmp.eq.s32.totalorder %s47, 15
      %p159 = por %p157, %p158
      %p161 = scmp.ne.s32.totalorder %s144, %s160
      %p162 = scmp.eq.s32.totalorder %s47, 0
      %p163 = por %p161, %p162
      %s164 = ssub.s32 %s50, %s59
      %p165 = scmp.eq.s32.totalorder %s164, 0
      %s167 = sadd.s32 %s166, 1
      %s168 = scalar_select %p165, %s166, %s167
      %p171 = pneg %p165
      %p172 = scmp.eq.s32.totalorder %s41, 15
      %p173 = por %p171, %p172
      %p174 = scmp.ne.s32.totalorder %s166, %s169
      %p175 = scmp.eq.s32.totalorder %s41, 0
      %p176 = por %p174, %p175
      %p177 = scmp.ne.s32.totalorder %s166, %s169
      %p178 = scmp.eq.s32.totalorder %s46, 15
      %p179 = por %p177, %p178
      %p180 = scmp.ne.s32.totalorder %s169, %s170
      %p181 = scmp.eq.s32.totalorder %s46, 0
      %p182 = por %p180, %p181
      %p183 = scmp.ne.s32.totalorder %s169, %s170
      %p184 = scmp.eq.s32.totalorder %s47, 15
      %p185 = por %p183, %p184
      %p187 = scmp.ne.s32.totalorder %s170, %s186
      %p188 = scmp.eq.s32.totalorder %s47, 0
      %p189 = por %p187, %p188
      %s190 = ssub.s32 %s50, %s59
      %p191 = scmp.eq.s32.totalorder %s190, 0
      %s193 = sadd.s32 %s192, 1
      %s194 = scalar_select %p191, %s192, %s193
      %p197 = pneg %p191
      %p198 = scmp.eq.s32.totalorder %s41, 15
      %p199 = por %p197, %p198
      %p200 = scmp.ne.s32.totalorder %s192, %s195
      %p201 = scmp.eq.s32.totalorder %s41, 0
      %p202 = por %p200, %p201
      %p203 = scmp.ne.s32.totalorder %s192, %s195
      %p204 = scmp.eq.s32.totalorder %s46, 15
      %p205 = por %p203, %p204
      %p206 = scmp.ne.s32.totalorder %s195, %s196
      %p207 = scmp.eq.s32.totalorder %s46, 0
      %p208 = por %p206, %p207
      %p209 = scmp.ne.s32.totalorder %s195, %s196
      %p210 = scmp.eq.s32.totalorder %s47, 15
      %p211 = por %p209, %p210
      %p213 = scmp.ne.s32.totalorder %s196, %s212
      %p214 = scmp.eq.s32.totalorder %s47, 0
      %p215 = por %p213, %p214
      %s216 = ssub.s32 %s50, %s59
      %p217 = scmp.eq.s32.totalorder %s216, 0
      %s219 = sadd.s32 %s218, 1
      %s220 = scalar_select %p217, %s218, %s219
      %p223 = pneg %p217
      %p224 = scmp.eq.s32.totalorder %s41, 15
      %p225 = por %p223, %p224
      %p226 = scmp.ne.s32.totalorder %s218, %s221
      %p227 = scmp.eq.s32.totalorder %s41, 0
      %p228 = por %p226, %p227
      %p229 = scmp.ne.s32.totalorder %s218, %s221
      %p230 = scmp.eq.s32.totalorder %s46, 15
      %p231 = por %p229, %p230
      %p232 = scmp.ne.s32.totalorder %s221, %s222
      %p233 = scmp.eq.s32.totalorder %s46, 0
      %p234 = por %p232, %p233
      %p235 = scmp.ne.s32.totalorder %s221, %s222
      %p236 = scmp.eq.s32.totalorder %s47, 15
      %p237 = por %p235, %p236
      %p239 = scmp.ne.s32.totalorder %s222, %s238
      %p240 = scmp.eq.s32.totalorder %s47, 0
      %p241 = por %p239, %p240
      %s243 = sadd.s32 %s242, 1
      %p246 = scmp.eq.s32.totalorder %s41, 15
      %p247 = scmp.ne.s32.totalorder %s242, %s244
      %p248 = scmp.eq.s32.totalorder %s41, 0
      %p249 = por %p247, %p248
      %p250 = scmp.ne.s32.totalorder %s242, %s244
      %p251 = scmp.eq.s32.totalorder %s46, 15
      %p252 = por %p250, %p251
      %p253 = scmp.ne.s32.totalorder %s244, %s245
      %p254 = scmp.eq.s32.totalorder %s46, 0
      %p255 = por %p253, %p254
      %p256 = scmp.ne.s32.totalorder %s244, %s245
      %p257 = scmp.eq.s32.totalorder %s47, 15
      %p258 = por %p256, %p257
      %p260 = scmp.ne.s32.totalorder %s245, %s259
      %p261 = scmp.eq.s32.totalorder %s47, 0
      %p262 = por %p260, %p261
      %s264 = sadd.s32 %s263, 1
      %p267 = scmp.eq.s32.totalorder %s41, 15
      %p268 = scmp.ne.s32.totalorder %s263, %s265
      %p269 = scmp.eq.s32.totalorder %s41, 0
      %p270 = por %p268, %p269
      %p271 = scmp.ne.s32.totalorder %s263, %s265
      %p272 = scmp.eq.s32.totalorder %s46, 15
      %p273 = por %p271, %p272
      %p274 = scmp.ne.s32.totalorder %s265, %s266
      %p275 = scmp.eq.s32.totalorder %s46, 0
      %p276 = por %p274, %p275
      %p277 = scmp.ne.s32.totalorder %s265, %s266
      %p278 = scmp.eq.s32.totalorder %s47, 15
      %p279 = por %p277, %p278
      %p281 = scmp.ne.s32.totalorder %s266, %s280
      %p282 = scmp.eq.s32.totalorder %s47, 0
      %p283 = por %p281, %p282
      %s285 = sadd.s32 %s284, 1
      %p288 = scmp.eq.s32.totalorder %s41, 15
      %p289 = scmp.ne.s32.totalorder %s284, %s286
      %p290 = scmp.eq.s32.totalorder %s41, 0
      %p291 = por %p289, %p290
      %p292 = scmp.ne.s32.totalorder %s284, %s286
      %p293 = scmp.eq.s32.totalorder %s46, 15
      %p294 = por %p292, %p293
      %p295 = scmp.ne.s32.totalorder %s286, %s287
      %p296 = scmp.eq.s32.totalorder %s46, 0
      %p297 = por %p295, %p296
      %p298 = scmp.ne.s32.totalorder %s286, %s287
      %p299 = scmp.eq.s32.totalorder %s47, 15
      %p300 = por %p298, %p299
      %p302 = scmp.ne.s32.totalorder %s287, %s301
      %p303 = scmp.eq.s32.totalorder %s47, 0
      %p304 = por %p302, %p303
      %s306 = sadd.s32 %s305, 1
      %p309 = scmp.eq.s32.totalorder %s41, 15
      %p310 = scmp.ne.s32.totalorder %s305, %s307
      %p311 = scmp.eq.s32.totalorder %s41, 0
      %p312 = por %p310, %p311
      %p313 = scmp.ne.s32.totalorder %s305, %s307
      %p314 = scmp.eq.s32.totalorder %s46, 15
      %p315 = por %p313, %p314
      %p316 = scmp.ne.s32.totalorder %s307, %s308
      %p317 = scmp.eq.s32.totalorder %s46, 0
      %p318 = por %p316, %p317
      %p319 = scmp.ne.s32.totalorder %s307, %s308
      %p320 = scmp.eq.s32.totalorder %s47, 15
      %p321 = por %p319, %p320
      %p323 = scmp.ne.s32.totalorder %s308, %s322
      %p324 = scmp.eq.s32.totalorder %s47, 0
      %p325 = por %p323, %p324
      %s326 = ssub.s32 %s48, %s67
      %s327 = ssub.s32 %s49, %s63
      %s328 = sor.u32 %s326, %s327
      %p329 = scmp.eq.s32.totalorder %s328, 0
      %s331 = sadd.s32 %s330, 1
      %s332 = scalar_select %p329, %s330, %s331
      %p335 = pneg %p329
      %p336 = scmp.eq.s32.totalorder %s41, 15
      %p337 = por %p335, %p336
      %p338 = scmp.ne.s32.totalorder %s330, %s333
      %p339 = scmp.eq.s32.totalorder %s41, 0
      %p340 = por %p338, %p339
      %p341 = scmp.ne.s32.totalorder %s330, %s333
      %p342 = scmp.eq.s32.totalorder %s46, 15
      %p343 = por %p341, %p342
      %p344 = scmp.ne.s32.totalorder %s333, %s334
      %p345 = scmp.eq.s32.totalorder %s46, 0
      %p346 = por %p344, %p345
      %p347 = scmp.ne.s32.totalorder %s333, %s334
      %p348 = scmp.eq.s32.totalorder %s47, 15
      %p349 = por %p347, %p348
      %p351 = scmp.ne.s32.totalorder %s334, %s350
      %p352 = scmp.eq.s32.totalorder %s47, 0
      %p353 = por %p351, %p352
      %p354 = scmp.le.s32.totalorder 1, %s41
      %p355 = scmp.lt.s32.totalorder %s41, 17
      %p356 = pnand %p354, %p355
      %p357 = pneg %p356
      // Predicated region
      $region9: #{tpu_custom_call.1} parent=5 // pred_check
        _
      $region10: #{tpu_custom_call.1} parent=5 // pred_check_branch
        %359 = sbr.rel (%p356) target = $region12
      $region11: #{tpu_custom_call.1} parent=5 // pred_region
        %s360 = ssub.s32 %s41, 1
        // Predicated region
        $region13: #{tpu_custom_call.1} parent=11 // pred_check
          %p361 = pneg %p109
        $region14: #{tpu_custom_call.1} parent=11 // pred_check_branch
          %363 = sbr.rel (%p361) target = $region16
        $region15: #{tpu_custom_call.1} parent=11 // pred_region
          %365 = vsyncadd [#allocation11], 0
          %s366 = sshll.u32 %s2, 4
          %s367 = int_to_ptr.hbm [resolvable:$true] %s366
          %s368 = sshll.u32 [#allocation10], 4
          %s369 = int_to_ptr.vmem [resolvable:$true] %s368
          %374 = dma.hbm_to_vmem [thread:$0]  %s367, 2048, %s369, [#allocation11], 128, 128, 8
        $region16: #{tpu_custom_call.1} parent=11 // pred_fallthru
          _
        // Predicated region
        $region17: #{tpu_custom_call.1} parent=11 // pred_check
          %p375 = pneg %p130
        $region18: #{tpu_custom_call.1} parent=11 // pred_check_branch
          %377 = sbr.rel (%p375) target = $region20
        $region19: #{tpu_custom_call.1} parent=11 // pred_region
          %379 = vsyncadd [#allocation11], 0
          %s381 = sshll.u32 %s3, 4
          %s382 = int_to_ptr.hbm [resolvable:$true] %s381
          %s383 = sshll.u32 [#allocation12], 4
          %s384 = int_to_ptr.vmem [resolvable:$true] %s383
          %386 = dma.hbm_to_vmem [thread:$0]  %s382, 16, %s384, [#allocation11]
        $region20: #{tpu_custom_call.1} parent=11 // pred_fallthru
          _
        // Predicated region
        $region21: #{tpu_custom_call.1} parent=11 // pred_check
          %p387 = pneg %p255
        $region22: #{tpu_custom_call.1} parent=11 // pred_check_branch
          %389 = sbr.rel (%p387) target = $region24
        $region23: #{tpu_custom_call.1} parent=11 // pred_region
          %391 = vsyncadd [#allocation20], 0
          %s392 = sshll.u32 %s8, 4
          %s393 = int_to_ptr.hbm [resolvable:$true] %s392
          %s394 = sshll.u32 [#allocation19], 4
          %s395 = int_to_ptr.vmem [resolvable:$true] %s394
          %400 = dma.hbm_to_vmem [thread:$0]  %s393, 2048, %s395, [#allocation20], 128, 128, 8
        $region24: #{tpu_custom_call.1} parent=11 // pred_fallthru
          _
        // Predicated region
        $region25: #{tpu_custom_call.1} parent=11 // pred_check
          %p401 = pneg %p276
        $region26: #{tpu_custom_call.1} parent=11 // pred_check_branch
          %403 = sbr.rel (%p401) target = $region28
        $region27: #{tpu_custom_call.1} parent=11 // pred_region
          %405 = vsyncadd [#allocation20], 0
          %s407 = sshll.u32 %s9, 4
          %s408 = int_to_ptr.hbm [resolvable:$true] %s407
          %s409 = sshll.u32 [#allocation21], 4
          %s410 = int_to_ptr.vmem [resolvable:$true] %s409
          %412 = dma.hbm_to_vmem [thread:$0]  %s408, 16, %s410, [#allocation20]
        $region28: #{tpu_custom_call.1} parent=11 // pred_fallthru
          _
        // Predicated region
        $region29: #{tpu_custom_call.1} parent=11 // pred_check
          %p413 = pneg %p297
        $region30: #{tpu_custom_call.1} parent=11 // pred_check_branch
          %415 = sbr.rel (%p413) target = $region32
        $region31: #{tpu_custom_call.1} parent=11 // pred_region
          %417 = vsyncadd [#allocation23], 0
          %s418 = sshll.u32 %s10, 4
          %s419 = int_to_ptr.hbm [resolvable:$true] %s418
          %s420 = sshll.u32 [#allocation22], 4
          %s421 = int_to_ptr.vmem [resolvable:$true] %s420
          %426 = dma.hbm_to_vmem [thread:$0]  %s419, 2048, %s421, [#allocation23], 128, 128, 8
        $region32: #{tpu_custom_call.1} parent=11 // pred_fallthru
          _
        // Predicated region
        $region33: #{tpu_custom_call.1} parent=11 // pred_check
          %p427 = pneg %p318
        $region34: #{tpu_custom_call.1} parent=11 // pred_check_branch
          %429 = sbr.rel (%p427) target = $region36
        $region35: #{tpu_custom_call.1} parent=11 // pred_region
          %431 = vsyncadd [#allocation23], 0
          %s433 = sshll.u32 %s11, 4
          %s434 = int_to_ptr.hbm [resolvable:$true] %s433
          %s435 = sshll.u32 [#allocation24], 4
          %s436 = int_to_ptr.vmem [resolvable:$true] %s435
          %438 = dma.hbm_to_vmem [thread:$0]  %s434, 16, %s436, [#allocation23]
        $region36: #{tpu_custom_call.1} parent=11 // pred_fallthru
          _
      $region12: #{tpu_custom_call.1} parent=5 // pred_fallthru
        _
      %p439 = scmp.lt.s32.totalorder %s41, 16
      // Predicated region
      $region37: #{tpu_custom_call.1} parent=5 // pred_check
        %p440 = pneg %p439
      $region38: #{tpu_custom_call.1} parent=5 // pred_check_branch
        %442 = sbr.rel (%p440) target = $region40
      $region39: #{tpu_custom_call.1} parent=5 // pred_region
        // Predicated region
        $region41: #{tpu_custom_call.1} parent=39 // pred_check
          %p443 = pneg %p82
        $region42: #{tpu_custom_call.1} parent=39 // pred_check_branch
          %445 = sbr.rel (%p443) target = $region44
        $region43: #{tpu_custom_call.1} parent=39 // pred_region
          %s446 = sand.u32 %s72, 1
          %s447 = scalar_lea.sflag [#allocation8], %s446
          %s448 = sand.u32 %s72, 1
          %s449 = smul.addr %s448, 32
          %s450 = scalar_lea.vmem [#allocation7], %s449
          %s451 = smul.u32 4, %s49
          %453 = vsyncadd %s447, 0
          %s454 = smul.addr %s48, 8
          %s455 = sadd.s32 %s451, %s454
          %s456 = smul.addr %s455, 8
          %s457 = scalar_lea.hbm %s1, %s456
          %s458 = sshll.u32 %s457, 4
          %s459 = int_to_ptr.hbm [resolvable:$true] %s458
          %s460 = sshll.u32 %s450, 4
          %s461 = int_to_ptr.vmem [resolvable:$true] %s460
          %466 = dma.hbm_to_vmem [thread:$0]  %s459, 512, %s461, %s447, 128, 128, 8
        $region44: #{tpu_custom_call.1} parent=39 // pred_fallthru
          _
        // Predicated region
        $region45: #{tpu_custom_call.1} parent=39 // pred_check
          %p467 = pneg %p150
        $region46: #{tpu_custom_call.1} parent=39 // pred_check_branch
          %469 = sbr.rel (%p467) target = $region48
        $region47: #{tpu_custom_call.1} parent=39 // pred_region
          %s470 = sand.u32 %s41, 1
          %s471 = scalar_lea.sflag [#allocation14], %s470
          %s472 = sand.u32 %s140, 1
          %s473 = smul.addr %s472, 768
          %s474 = scalar_lea.vmem [#allocation13], %s473
          %476 = vsyncadd %s471, 0
          %s477 = smul.addr %s50, 96
          %s478 = smul.addr %s477, 8
          %s479 = scalar_lea.hbm %s4, %s478
          %s480 = sshll.u32 %s479, 4
          %s481 = int_to_ptr.hbm [resolvable:$true] %s480
          %s482 = sshll.u32 %s474, 4
          %s483 = int_to_ptr.vmem [resolvable:$true] %s482
          %488 = dma.hbm_to_vmem [thread:$0]  %s481, 12288, %s483, %s471, 256, 256, 16
        $region48: #{tpu_custom_call.1} parent=39 // pred_fallthru
          _
        // Predicated region
        $region49: #{tpu_custom_call.1} parent=39 // pred_check
          %p489 = pneg %p176
        $region50: #{tpu_custom_call.1} parent=39 // pred_check_branch
          %491 = sbr.rel (%p489) target = $region52
        $region51: #{tpu_custom_call.1} parent=39 // pred_region
          %s492 = sand.u32 %s41, 1
          %s493 = scalar_lea.sflag [#allocation14], %s492
          %s494 = sand.u32 %s166, 1
          %s495 = smul.addr %s494, 2
          %s496 = scalar_lea.vmem [#allocation15], %s495
          %498 = vsyncadd %s493, 0
          %s499 = smul.addr %s50, 2
          %s500 = scalar_lea.hbm %s5, %s499
          %s502 = sshll.u32 %s500, 4
          %s503 = int_to_ptr.hbm [resolvable:$true] %s502
          %s504 = sshll.u32 %s496, 4
          %s505 = int_to_ptr.vmem [resolvable:$true] %s504
          %507 = dma.hbm_to_vmem [thread:$0]  %s503, 32, %s505, %s493
        $region52: #{tpu_custom_call.1} parent=39 // pred_fallthru
          _
        // Predicated region
        $region53: #{tpu_custom_call.1} parent=39 // pred_check
          %p508 = pneg %p202
        $region54: #{tpu_custom_call.1} parent=39 // pred_check_branch
          %510 = sbr.rel (%p508) target = $region56
        $region55: #{tpu_custom_call.1} parent=39 // pred_region
          %s511 = sand.u32 %s41, 1
          %s512 = scalar_lea.sflag [#allocation17], %s511
          %s513 = sand.u32 %s192, 1
          %s514 = smul.addr %s513, 128
          %s515 = scalar_lea.vmem [#allocation16], %s514
          %517 = vsyncadd %s512, 0
          %s518 = smul.addr %s50, 16
          %s519 = smul.addr %s518, 8
          %s520 = scalar_lea.hbm %s6, %s519
          %s521 = sshll.u32 %s520, 4
          %s522 = int_to_ptr.hbm [resolvable:$true] %s521
          %s523 = sshll.u32 %s515, 4
          %s524 = int_to_ptr.vmem [resolvable:$true] %s523
          %529 = dma.hbm_to_vmem [thread:$0]  %s522, 2048, %s524, %s512, 128, 128, 8
        $region56: #{tpu_custom_call.1} parent=39 // pred_fallthru
          _
        // Predicated region
        $region57: #{tpu_custom_call.1} parent=39 // pred_check
          %p530 = pneg %p228
        $region58: #{tpu_custom_call.1} parent=39 // pred_check_branch
          %532 = sbr.rel (%p530) target = $region60
        $region59: #{tpu_custom_call.1} parent=39 // pred_region
          %s533 = sand.u32 %s41, 1
          %s534 = scalar_lea.sflag [#allocation17], %s533
          %s535 = sand.u32 %s218, 1
          %s536 = scalar_lea.vmem [#allocation18], %s535
          %538 = vsyncadd %s534, 0
          %s539 = scalar_lea.hbm %s7, %s50
          %s541 = sshll.u32 %s539, 4
          %s542 = int_to_ptr.hbm [resolvable:$true] %s541
          %s543 = sshll.u32 %s536, 4
          %s544 = int_to_ptr.vmem [resolvable:$true] %s543
          %546 = dma.hbm_to_vmem [thread:$0]  %s542, 16, %s544, %s534
        $region60: #{tpu_custom_call.1} parent=39 // pred_fallthru
          _
      $region40: #{tpu_custom_call.1} parent=5 // pred_fallthru
        _
      %p547 = scmp.le.s32.totalorder 1, %s41
      %p548 = scmp.lt.s32.totalorder %s41, 17
      %p549 = pnand %p547, %p548
      %p550 = pneg %p549
      // Predicated region
      $region61: #{tpu_custom_call.1} parent=5 // pred_check
        _
      $region62: #{tpu_custom_call.1} parent=5 // pred_check_branch
        %552 = sbr.rel (%p549) target = $region64
      $region63: #{tpu_custom_call.1} parent=5 // pred_region
        %s553 = ssub.s32 %s41, 1
        %s554 = sand.u32 %s75, 1
        %s555 = scalar_lea.sflag [#allocation8], %s554
        %s556 = sand.u32 %s75, 1
        %s557 = smul.addr %s556, 32
        %s558 = scalar_lea.vmem [#allocation7], %s557
        // Predicated region
        $region65: #{tpu_custom_call.1} parent=63 // pred_check
          %p559 = pneg %p88
        $region66: #{tpu_custom_call.1} parent=63 // pred_check_branch
          %561 = sbr.rel (%p559) target = $region68
        $region67: #{tpu_custom_call.1} parent=63 // pred_region
          %563 = dma.done %s555, 512
        $region68: #{tpu_custom_call.1} parent=63 // pred_fallthru
          _
        // Predicated region
        $region69: #{tpu_custom_call.1} parent=63 // pred_check
          %p564 = pneg %p109
        $region70: #{tpu_custom_call.1} parent=63 // pred_check_branch
          %566 = sbr.rel (%p564) target = $region72
        $region71: #{tpu_custom_call.1} parent=63 // pred_region
          %568 = dma.done [#allocation11], 2048
        $region72: #{tpu_custom_call.1} parent=63 // pred_fallthru
          _
        // Predicated region
        $region73: #{tpu_custom_call.1} parent=63 // pred_check
          %p569 = pneg %p130
        $region74: #{tpu_custom_call.1} parent=63 // pred_check_branch
          %571 = sbr.rel (%p569) target = $region76
        $region75: #{tpu_custom_call.1} parent=63 // pred_region
          %573 = dma.done [#allocation11], 16
        $region76: #{tpu_custom_call.1} parent=63 // pred_fallthru
          _
        %s574 = sand.u32 %s46, 1
        %s575 = scalar_lea.sflag [#allocation14], %s574
        %s576 = sand.u32 %s143, 1
        %s577 = smul.addr %s576, 768
        %s578 = scalar_lea.vmem [#allocation13], %s577
        // Predicated region
        $region77: #{tpu_custom_call.1} parent=63 // pred_check
          %p579 = pneg %p156
        $region78: #{tpu_custom_call.1} parent=63 // pred_check_branch
          %581 = sbr.rel (%p579) target = $region80
        $region79: #{tpu_custom_call.1} parent=63 // pred_region
          %583 = dma.done %s575, 12288
        $region80: #{tpu_custom_call.1} parent=63 // pred_fallthru
          _
        %s584 = sand.u32 %s46, 1
        %s585 = scalar_lea.sflag [#allocation14], %s584
        %s586 = sand.u32 %s169, 1
        %s587 = smul.addr %s586, 2
        %s588 = scalar_lea.vmem [#allocation15], %s587
        // Predicated region
        $region81: #{tpu_custom_call.1} parent=63 // pred_check
          %p589 = pneg %p182
        $region82: #{tpu_custom_call.1} parent=63 // pred_check_branch
          %591 = sbr.rel (%p589) target = $region84
        $region83: #{tpu_custom_call.1} parent=63 // pred_region
          %593 = dma.done %s585, 32
        $region84: #{tpu_custom_call.1} parent=63 // pred_fallthru
          _
        %s594 = sand.u32 %s46, 1
        %s595 = scalar_lea.sflag [#allocation17], %s594
        %s596 = sand.u32 %s195, 1
        %s597 = smul.addr %s596, 128
        %s598 = scalar_lea.vmem [#allocation16], %s597
        // Predicated region
        $region85: #{tpu_custom_call.1} parent=63 // pred_check
          %p599 = pneg %p208
        $region86: #{tpu_custom_call.1} parent=63 // pred_check_branch
          %601 = sbr.rel (%p599) target = $region88
        $region87: #{tpu_custom_call.1} parent=63 // pred_region
          %603 = dma.done %s595, 2048
        $region88: #{tpu_custom_call.1} parent=63 // pred_fallthru
          _
        %s604 = sand.u32 %s46, 1
        %s605 = scalar_lea.sflag [#allocation17], %s604
        %s606 = sand.u32 %s221, 1
        %s607 = scalar_lea.vmem [#allocation18], %s606
        // Predicated region
        $region89: #{tpu_custom_call.1} parent=63 // pred_check
          %p608 = pneg %p234
        $region90: #{tpu_custom_call.1} parent=63 // pred_check_branch
          %610 = sbr.rel (%p608) target = $region92
        $region91: #{tpu_custom_call.1} parent=63 // pred_region
          %612 = dma.done %s605, 16
        $region92: #{tpu_custom_call.1} parent=63 // pred_fallthru
          _
        // Predicated region
        $region93: #{tpu_custom_call.1} parent=63 // pred_check
          %p613 = pneg %p255
        $region94: #{tpu_custom_call.1} parent=63 // pred_check_branch
          %615 = sbr.rel (%p613) target = $region96
        $region95: #{tpu_custom_call.1} parent=63 // pred_region
          %617 = dma.done [#allocation20], 2048
        $region96: #{tpu_custom_call.1} parent=63 // pred_fallthru
          _
        // Predicated region
        $region97: #{tpu_custom_call.1} parent=63 // pred_check
          %p618 = pneg %p276
        $region98: #{tpu_custom_call.1} parent=63 // pred_check_branch
          %620 = sbr.rel (%p618) target = $region100
        $region99: #{tpu_custom_call.1} parent=63 // pred_region
          %622 = dma.done [#allocation20], 16
        $region100: #{tpu_custom_call.1} parent=63 // pred_fallthru
          _
        // Predicated region
        $region101: #{tpu_custom_call.1} parent=63 // pred_check
          %p623 = pneg %p297
        $region102: #{tpu_custom_call.1} parent=63 // pred_check_branch
          %625 = sbr.rel (%p623) target = $region104
        $region103: #{tpu_custom_call.1} parent=63 // pred_region
          %627 = dma.done [#allocation23], 2048
        $region104: #{tpu_custom_call.1} parent=63 // pred_fallthru
          _
        // Predicated region
        $region105: #{tpu_custom_call.1} parent=63 // pred_check
          %p628 = pneg %p318
        $region106: #{tpu_custom_call.1} parent=63 // pred_check_branch
          %630 = sbr.rel (%p628) target = $region108
        $region107: #{tpu_custom_call.1} parent=63 // pred_region
          %632 = dma.done [#allocation23], 16
        $region108: #{tpu_custom_call.1} parent=63 // pred_fallthru
          _
        %s633 = sand.u32 %s75, 1
        %s634 = scalar_lea.sflag [#allocation8], %s633
        %s635 = sand.u32 %s75, 1
        %s636 = smul.addr %s635, 32
        %s637 = scalar_lea.vmem [#allocation7], %s636
        %p638 = pneg %p88
        %p639 = pneg %p85
        %p640 = pneg %p109
        %p641 = pneg %p106
        %p642 = pneg %p130
        %p643 = pneg %p127
        %s644 = sand.u32 %s46, 1
        %s645 = scalar_lea.sflag [#allocation14], %s644
        %s646 = sand.u32 %s143, 1
        %s647 = smul.addr %s646, 768
        %s648 = scalar_lea.vmem [#allocation13], %s647
        %p649 = pneg %p156
        %p650 = pneg %p153
        %s651 = sand.u32 %s46, 1
        %s652 = scalar_lea.sflag [#allocation14], %s651
        %s653 = sand.u32 %s169, 1
        %s654 = smul.addr %s653, 2
        %s655 = scalar_lea.vmem [#allocation15], %s654
        %p656 = pneg %p182
        %p657 = pneg %p179
        %s658 = sand.u32 %s46, 1
        %s659 = scalar_lea.sflag [#allocation17], %s658
        %s660 = sand.u32 %s195, 1
        %s661 = smul.addr %s660, 128
        %s662 = scalar_lea.vmem [#allocation16], %s661
        %p663 = pneg %p208
        %p664 = pneg %p205
        %s665 = sand.u32 %s46, 1
        %s666 = scalar_lea.sflag [#allocation17], %s665
        %s667 = sand.u32 %s221, 1
        %s668 = scalar_lea.vmem [#allocation18], %s667
        %p669 = pneg %p234
        %p670 = pneg %p231
        %p671 = pneg %p255
        %p672 = pneg %p252
        %p673 = pneg %p276
        %p674 = pneg %p273
        %p675 = pneg %p297
        %p676 = pneg %p294
        %p677 = pneg %p318
        %p678 = pneg %p315
        %p679 = pneg %p346
        %p680 = pneg %p343
        %s681 = sand.u32 %s333, 1
        %s682 = scalar_lea.sflag [#allocation9], %s681
        %s683 = sand.u32 %s333, 1
        %s684 = smul.addr %s683, 32
        %s685 = scalar_lea.vmem [#allocation25], %s684
        %s686 = smul.u32 4, %s52
        %s687 = smul.u32 4, %s52
        %p688 = scmp.eq.s32.totalorder %s53, 0
        // Predicated region
        $region109: #{tpu_custom_call.1} parent=63 // pred_check
          %p689 = pneg %p688
        $region110: #{tpu_custom_call.1} parent=63 // pred_check_branch
          %691 = sbr.rel (%p689) target = $region112
        $region111: #{tpu_custom_call.1} parent=63 // pred_region
          %v692 = vld [vmem:[%s558] sm:$0xff]
          %v693 = vld [vmem:[%s558 + $0x8] sm:$0xff]
          %v694 = vld [vmem:[%s558 + $0x10] sm:$0xff]
          %v695 = vld [vmem:[%s558 + $0x18] sm:$0xff]
          %v696 = vld [vmem:[#allocation10] sm:$0xff]
          %v697 = vld [vmem:[#allocation10 + $0x8] sm:$0xff]
          %v698 = vld [vmem:[#allocation10 + $0x10] sm:$0xff]
          %v699 = vld [vmem:[#allocation10 + $0x18] sm:$0xff]
          %v700 = vld [vmem:[#allocation10 + $0x20] sm:$0xff]
          %v701 = vld [vmem:[#allocation10 + $0x28] sm:$0xff]
          %v702 = vld [vmem:[#allocation10 + $0x30] sm:$0xff]
          %v703 = vld [vmem:[#allocation10 + $0x38] sm:$0xff]
          %v704 = vld [vmem:[#allocation10 + $0x40] sm:$0xff]
          %v705 = vld [vmem:[#allocation10 + $0x48] sm:$0xff]
          %v706 = vld [vmem:[#allocation10 + $0x50] sm:$0xff]
          %v707 = vld [vmem:[#allocation10 + $0x58] sm:$0xff]
          %v708 = vld [vmem:[#allocation10 + $0x60] sm:$0xff]
          %v709 = vld [vmem:[#allocation10 + $0x68] sm:$0xff]
          %v710 = vld [vmem:[#allocation10 + $0x70] sm:$0xff]
          %v711 = vld [vmem:[#allocation10 + $0x78] sm:$0xff]
          %v712 = vld [vmem:[#allocation12] sm:$0x1]
          %v714 = vperm.slane %v712, 0
          %716 = vmatpush.msra.mxu0 %v711
          %717 = vmatpush.msra.mxu0 %v710
          %718 = vmatpush.msra.mxu0 %v709
          %719 = vmatpush.msra.mxu0 %v708
          %720 = vmatpush.msra.mxu0 %v707
          %721 = vmatpush.msra.mxu0 %v706
          %722 = vmatpush.msra.mxu0 %v705
          %723 = vmatpush.msra.mxu0 %v704
          %724 = vmatpush.msra.mxu0 %v703
          %725 = vmatpush.msra.mxu0 %v702
          %726 = vmatpush.msra.mxu0 %v701
          %727 = vmatpush.msra.mxu0 %v700
          %728 = vmatpush.msra.mxu0 %v699
          %729 = vmatpush.msra.mxu0 %v698
          %730 = vmatpush.msra.mxu0 %v697
          %731 = vmatpush.msra.mxu0 %v696
          %732 = vmatmul.f32.gmra.mxu0 %v692
          %v733 = vpop.f32.mrf.mxu0
          %v734 = vadd.f32 %v714, %v733
          %735 = vmatmul.f32.gmra.mxu0 %v693
          %v736 = vpop.f32.mrf.mxu0
          %v737 = vadd.f32 %v714, %v736
          %738 = vmatmul.f32.gmra.mxu0 %v694
          %v739 = vpop.f32.mrf.mxu0
          %v740 = vadd.f32 %v714, %v739
          %741 = vmatmul.f32.gmra.mxu0 %v695
          %v742 = vpop.f32.mrf.mxu0
          %v743 = vadd.f32 %v714, %v742
          %744 = vdwg.mxu0
          %745 = vst [vmem:[#allocation3 + $0x8] sm:$0xff] %v734
          %746 = vst [vmem:[#allocation3 + $0x10] sm:$0xff] %v737
          %747 = vst [vmem:[#allocation3 + $0x18] sm:$0xff] %v740
          %748 = vst [vmem:[#allocation3 + $0x20] sm:$0xff] %v743
        $region112: #{tpu_custom_call.1} parent=63 // pred_fallthru
          _
        %p749 = scmp.eq.s32.totalorder %s52, 0
        // Predicated region
        $region113: #{tpu_custom_call.1} parent=63 // pred_check
          %p750 = pneg %p749
        $region114: #{tpu_custom_call.1} parent=63 // pred_check_branch
          %752 = sbr.rel (%p750) target = $region116
        $region115: #{tpu_custom_call.1} parent=63 // pred_region
          %s753 = smul.u32 %s53, 8
          %s754 = scalar_lea.vmem [#allocation2], %s753
          %755 = vst [vmem:[%s754] sm:$0xff] 0.0
        $region116: #{tpu_custom_call.1} parent=63 // pred_fallthru
          _
        %s756 = smul.u32 %s53, 8
        %s757 = scalar_lea.vmem [#allocation2], %s756
        %v758 = vld [vmem:[%s757] sm:$0xff]
        %759 = vst [vmem:[#allocation3] sm:$0xff] %v758
        %v760 = vld [vmem:[#allocation3 + $0x8] sm:$0xff]
        %v761 = vld [vmem:[#allocation3 + $0x10] sm:$0xff]
        %v762 = vld [vmem:[#allocation3 + $0x18] sm:$0xff]
        %v763 = vld [vmem:[#allocation3 + $0x20] sm:$0xff]
        %764 = vst [vmem:[%s757] sm:$0xff] %v763
        %s765 = sld [smem:[#allocation6 + %s53]]
        %s766 = smul.u32 %s765, 2
        %s767 = ssub.s32 8, %s766
        %s768 = scalar_lea.vmem [#allocation3], %s767
        %v769 = vld [vmem:[%s768] sm:$0xff]
        %v770 = vld [vmem:[%s768 + $0x8] sm:$0xff]
        %v771 = vld [vmem:[%s768 + $0x10] sm:$0xff]
        %v772 = vld [vmem:[%s768 + $0x18] sm:$0xff]
        %s773 = ssub.s32 8, %s765
        %s774 = scalar_lea.vmem [#allocation3], %s773
        %v775 = vld [vmem:[%s774] sm:$0xff]
        %v776 = vld [vmem:[%s774 + $0x8] sm:$0xff]
        %v777 = vld [vmem:[%s774 + $0x10] sm:$0xff]
        %v778 = vld [vmem:[%s774 + $0x18] sm:$0xff]
        %v779 = vld [vmem:[#allocation3 + $0x8] sm:$0xff]
        %v780 = vld [vmem:[#allocation3 + $0x10] sm:$0xff]
        %v781 = vld [vmem:[#allocation3 + $0x18] sm:$0xff]
        %v782 = vld [vmem:[#allocation3 + $0x20] sm:$0xff]
        %v783 = vld [vmem:[%s578] sm:$0xff]
        %v784 = vld [vmem:[%s578 + $0x8] sm:$0xff]
        %v785 = vld [vmem:[%s578 + $0x10] sm:$0xff]
        %v786 = vld [vmem:[%s578 + $0x18] sm:$0xff]
        %v787 = vld [vmem:[%s578 + $0x20] sm:$0xff]
        %v788 = vld [vmem:[%s578 + $0x28] sm:$0xff]
        %v789 = vld [vmem:[%s578 + $0x30] sm:$0xff]
        %v790 = vld [vmem:[%s578 + $0x38] sm:$0xff]
        %v791 = vld [vmem:[%s578 + $0x40] sm:$0xff]
        %v792 = vld [vmem:[%s578 + $0x48] sm:$0xff]
        %v793 = vld [vmem:[%s578 + $0x50] sm:$0xff]
        %v794 = vld [vmem:[%s578 + $0x58] sm:$0xff]
        %v795 = vld [vmem:[%s578 + $0x60] sm:$0xff]
        %v796 = vld [vmem:[%s578 + $0x68] sm:$0xff]
        %v797 = vld [vmem:[%s578 + $0x70] sm:$0xff]
        %v798 = vld [vmem:[%s578 + $0x78] sm:$0xff]
        %v799 = vld [vmem:[%s578 + $0x80] sm:$0xff]
        %v800 = vld [vmem:[%s578 + $0x88] sm:$0xff]
        %v801 = vld [vmem:[%s578 + $0x90] sm:$0xff]
        %v802 = vld [vmem:[%s578 + $0x98] sm:$0xff]
        %v803 = vld [vmem:[%s578 + $0xa0] sm:$0xff]
        %v804 = vld [vmem:[%s578 + $0xa8] sm:$0xff]
        %v805 = vld [vmem:[%s578 + $0xb0] sm:$0xff]
        %v806 = vld [vmem:[%s578 + $0xb8] sm:$0xff]
        %v807 = vld [vmem:[%s578 + $0xc0] sm:$0xff]
        %v808 = vld [vmem:[%s578 + $0xc8] sm:$0xff]
        %v809 = vld [vmem:[%s578 + $0xd0] sm:$0xff]
        %v810 = vld [vmem:[%s578 + $0xd8] sm:$0xff]
        %v811 = vld [vmem:[%s578 + $0xe0] sm:$0xff]
        %v812 = vld [vmem:[%s578 + $0xe8] sm:$0xff]
        %v813 = vld [vmem:[%s578 + $0xf0] sm:$0xff]
        %v814 = vld [vmem:[%s578 + $0xf8] sm:$0xff]
        %v815 = vld [vmem:[%s578 + $0x100] sm:$0xff]
        %v816 = vld [vmem:[%s578 + $0x108] sm:$0xff]
        %v817 = vld [vmem:[%s578 + $0x110] sm:$0xff]
        %v818 = vld [vmem:[%s578 + $0x118] sm:$0xff]
        %v819 = vld [vmem:[%s578 + $0x120] sm:$0xff]
        %v820 = vld [vmem:[%s578 + $0x128] sm:$0xff]
        %v821 = vld [vmem:[%s578 + $0x130] sm:$0xff]
        %v822 = vld [vmem:[%s578 + $0x138] sm:$0xff]
        %v823 = vld [vmem:[%s578 + $0x140] sm:$0xff]
        %v824 = vld [vmem:[%s578 + $0x148] sm:$0xff]
        %v825 = vld [vmem:[%s578 + $0x150] sm:$0xff]
        %v826 = vld [vmem:[%s578 + $0x158] sm:$0xff]
        %v827 = vld [vmem:[%s578 + $0x160] sm:$0xff]
        %v828 = vld [vmem:[%s578 + $0x168] sm:$0xff]
        %v829 = vld [vmem:[%s578 + $0x170] sm:$0xff]
        %v830 = vld [vmem:[%s578 + $0x178] sm:$0xff]
        %v831 = vld [vmem:[%s578 + $0x180] sm:$0xff]
        %v832 = vld [vmem:[%s578 + $0x188] sm:$0xff]
        %v833 = vld [vmem:[%s578 + $0x190] sm:$0xff]
        %v834 = vld [vmem:[%s578 + $0x198] sm:$0xff]
        %v835 = vld [vmem:[%s578 + $0x1a0] sm:$0xff]
        %v836 = vld [vmem:[%s578 + $0x1a8] sm:$0xff]
        %v837 = vld [vmem:[%s578 + $0x1b0] sm:$0xff]
        %v838 = vld [vmem:[%s578 + $0x1b8] sm:$0xff]
        %v839 = vld [vmem:[%s578 + $0x1c0] sm:$0xff]
        %v840 = vld [vmem:[%s578 + $0x1c8] sm:$0xff]
        %v841 = vld [vmem:[%s578 + $0x1d0] sm:$0xff]
        %v842 = vld [vmem:[%s578 + $0x1d8] sm:$0xff]
        %v843 = vld [vmem:[%s578 + $0x1e0] sm:$0xff]
        %v844 = vld [vmem:[%s578 + $0x1e8] sm:$0xff]
        %v845 = vld [vmem:[%s578 + $0x1f0] sm:$0xff]
        %v846 = vld [vmem:[%s578 + $0x1f8] sm:$0xff]
        %v847 = vld [vmem:[%s578 + $0x200] sm:$0xff]
        %v848 = vld [vmem:[%s578 + $0x208] sm:$0xff]
        %v849 = vld [vmem:[%s578 + $0x210] sm:$0xff]
        %v850 = vld [vmem:[%s578 + $0x218] sm:$0xff]
        %v851 = vld [vmem:[%s578 + $0x220] sm:$0xff]
        %v852 = vld [vmem:[%s578 + $0x228] sm:$0xff]
        %v853 = vld [vmem:[%s578 + $0x230] sm:$0xff]
        %v854 = vld [vmem:[%s578 + $0x238] sm:$0xff]
        %v855 = vld [vmem:[%s578 + $0x240] sm:$0xff]
        %v856 = vld [vmem:[%s578 + $0x248] sm:$0xff]
        %v857 = vld [vmem:[%s578 + $0x250] sm:$0xff]
        %v858 = vld [vmem:[%s578 + $0x258] sm:$0xff]
        %v859 = vld [vmem:[%s578 + $0x260] sm:$0xff]
        %v860 = vld [vmem:[%s578 + $0x268] sm:$0xff]
        %v861 = vld [vmem:[%s578 + $0x270] sm:$0xff]
        %v862 = vld [vmem:[%s578 + $0x278] sm:$0xff]
        %v863 = vld [vmem:[%s578 + $0x280] sm:$0xff]
        %v864 = vld [vmem:[%s578 + $0x288] sm:$0xff]
        %v865 = vld [vmem:[%s578 + $0x290] sm:$0xff]
        %v866 = vld [vmem:[%s578 + $0x298] sm:$0xff]
        %v867 = vld [vmem:[%s578 + $0x2a0] sm:$0xff]
        %v868 = vld [vmem:[%s578 + $0x2a8] sm:$0xff]
        %v869 = vld [vmem:[%s578 + $0x2b0] sm:$0xff]
        %v870 = vld [vmem:[%s578 + $0x2b8] sm:$0xff]
        %v871 = vld [vmem:[%s578 + $0x2c0] sm:$0xff]
        %v872 = vld [vmem:[%s578 + $0x2c8] sm:$0xff]
        %v873 = vld [vmem:[%s578 + $0x2d0] sm:$0xff]
        %v874 = vld [vmem:[%s578 + $0x2d8] sm:$0xff]
        %v875 = vld [vmem:[%s578 + $0x2e0] sm:$0xff]
        %v876 = vld [vmem:[%s578 + $0x2e8] sm:$0xff]
        %v877 = vld [vmem:[%s578 + $0x2f0] sm:$0xff]
        %v878 = vld [vmem:[%s578 + $0x2f8] sm:$0xff]
        %v879 = vld [vmem:[%s588] sm:$0x3]
        %v881 = vperm.slane %v879, 0
        %v882 = vperm.slane %v879, 1
        %885 = vmatpush.msra.mxu0 %v813
        %886 = vmatpush.msra.mxu0 %v811
        %887 = vmatpush.msra.mxu0 %v809
        %888 = vmatpush.msra.mxu0 %v807
        %889 = vmatpush.msra.mxu0 %v805
        %890 = vmatpush.msra.mxu0 %v803
        %891 = vmatpush.msra.mxu0 %v801
        %892 = vmatpush.msra.mxu0 %v799
        %893 = vmatpush.msra.mxu0 %v797
        %894 = vmatpush.msra.mxu0 %v795
        %895 = vmatpush.msra.mxu0 %v793
        %896 = vmatpush.msra.mxu0 %v791
        %897 = vmatpush.msra.mxu0 %v789
        %898 = vmatpush.msra.mxu0 %v787
        %899 = vmatpush.msra.mxu0 %v785
        %900 = vmatpush.msra.mxu0 %v783
        %901 = vmatmul.f32.gmra.mxu0 %v769
        %v902 = vpop.f32.mrf.mxu0
        %v903 = vadd.f32 %v881, %v902
        %904 = vmatmul.f32.gmra.mxu0 %v770
        %v905 = vpop.f32.mrf.mxu0
        %v906 = vadd.f32 %v881, %v905
        %907 = vmatmul.f32.gmra.mxu0 %v771
        %v908 = vpop.f32.mrf.mxu0
        %v909 = vadd.f32 %v881, %v908
        %910 = vmatmul.f32.gmra.mxu0 %v772
        %v911 = vpop.f32.mrf.mxu0
        %v912 = vadd.f32 %v881, %v911
        %913 = vdwg.mxu0
        %914 = vmatpush.msra.mxu0 %v845
        %915 = vmatpush.msra.mxu0 %v843
        %916 = vmatpush.msra.mxu0 %v841
        %917 = vmatpush.msra.mxu0 %v839
        %918 = vmatpush.msra.mxu0 %v837
        %919 = vmatpush.msra.mxu0 %v835
        %920 = vmatpush.msra.mxu0 %v833
        %921 = vmatpush.msra.mxu0 %v831
        %922 = vmatpush.msra.mxu0 %v829
        %923 = vmatpush.msra.mxu0 %v827
        %924 = vmatpush.msra.mxu0 %v825
        %925 = vmatpush.msra.mxu0 %v823
        %926 = vmatpush.msra.mxu0 %v821
        %927 = vmatpush.msra.mxu0 %v819
        %928 = vmatpush.msra.mxu0 %v817
        %929 = vmatpush.msra.mxu0 %v815
        %930 = vmatmul.f32.gmra.mxu0 %v775
        %v931 = vpop.f32.mrf.mxu0
        %v932 = vadd.f32 %v903, %v931
        %933 = vmatmul.f32.gmra.mxu0 %v776
        %v934 = vpop.f32.mrf.mxu0
        %v935 = vadd.f32 %v906, %v934
        %936 = vmatmul.f32.gmra.mxu0 %v777
        %v937 = vpop.f32.mrf.mxu0
        %v938 = vadd.f32 %v909, %v937
        %939 = vmatmul.f32.gmra.mxu0 %v778
        %v940 = vpop.f32.mrf.mxu0
        %v941 = vadd.f32 %v912, %v940
        %942 = vdwg.mxu0
        %943 = vmatpush.msra.mxu0 %v877
        %944 = vmatpush.msra.mxu0 %v875
        %945 = vmatpush.msra.mxu0 %v873
        %946 = vmatpush.msra.mxu0 %v871
        %947 = vmatpush.msra.mxu0 %v869
        %948 = vmatpush.msra.mxu0 %v867
        %949 = vmatpush.msra.mxu0 %v865
        %950 = vmatpush.msra.mxu0 %v863
        %951 = vmatpush.msra.mxu0 %v861
        %952 = vmatpush.msra.mxu0 %v859
        %953 = vmatpush.msra.mxu0 %v857
        %954 = vmatpush.msra.mxu0 %v855
        %955 = vmatpush.msra.mxu0 %v853
        %956 = vmatpush.msra.mxu0 %v851
        %957 = vmatpush.msra.mxu0 %v849
        %958 = vmatpush.msra.mxu0 %v847
        %959 = vmatmul.f32.gmra.mxu0 %v779
        %v960 = vpop.f32.mrf.mxu0
        %v961 = vadd.f32 %v932, %v960
        %962 = vmatmul.f32.gmra.mxu0 %v780
        %v963 = vpop.f32.mrf.mxu0
        %v964 = vadd.f32 %v935, %v963
        %965 = vmatmul.f32.gmra.mxu0 %v781
        %v966 = vpop.f32.mrf.mxu0
        %v967 = vadd.f32 %v938, %v966
        %968 = vmatmul.f32.gmra.mxu0 %v782
        %v969 = vpop.f32.mrf.mxu0
        %v970 = vadd.f32 %v941, %v969
        %971 = vdwg.mxu0
        %972 = vmatpush.msra.mxu0 %v814
        %973 = vmatpush.msra.mxu0 %v812
        %974 = vmatpush.msra.mxu0 %v810
        %975 = vmatpush.msra.mxu0 %v808
        %976 = vmatpush.msra.mxu0 %v806
        %977 = vmatpush.msra.mxu0 %v804
        %978 = vmatpush.msra.mxu0 %v802
        %979 = vmatpush.msra.mxu0 %v800
        %980 = vmatpush.msra.mxu0 %v798
        %981 = vmatpush.msra.mxu0 %v796
        %982 = vmatpush.msra.mxu0 %v794
        %983 = vmatpush.msra.mxu0 %v792
        %984 = vmatpush.msra.mxu0 %v790
        %985 = vmatpush.msra.mxu0 %v788
        %986 = vmatpush.msra.mxu0 %v786
        %987 = vmatpush.msra.mxu0 %v784
        %988 = vmatmul.f32.gmra.mxu0 %v769
        %v989 = vpop.f32.mrf.mxu0
        %v990 = vadd.f32 %v882, %v989
        %991 = vmatmul.f32.gmra.mxu0 %v770
        %v992 = vpop.f32.mrf.mxu0
        %v993 = vadd.f32 %v882, %v992
        %994 = vmatmul.f32.gmra.mxu0 %v771
        %v995 = vpop.f32.mrf.mxu0
        %v996 = vadd.f32 %v882, %v995
        %997 = vmatmul.f32.gmra.mxu0 %v772
        %v998 = vpop.f32.mrf.mxu0
        %v999 = vadd.f32 %v882, %v998
        %1000 = vdwg.mxu0
        %1001 = vmatpush.msra.mxu0 %v846
        %1002 = vmatpush.msra.mxu0 %v844
        %1003 = vmatpush.msra.mxu0 %v842
        %1004 = vmatpush.msra.mxu0 %v840
        %1005 = vmatpush.msra.mxu0 %v838
        %1006 = vmatpush.msra.mxu0 %v836
        %1007 = vmatpush.msra.mxu0 %v834
        %1008 = vmatpush.msra.mxu0 %v832
        %1009 = vmatpush.msra.mxu0 %v830
        %1010 = vmatpush.msra.mxu0 %v828
        %1011 = vmatpush.msra.mxu0 %v826
        %1012 = vmatpush.msra.mxu0 %v824
        %1013 = vmatpush.msra.mxu0 %v822
        %1014 = vmatpush.msra.mxu0 %v820
        %1015 = vmatpush.msra.mxu0 %v818
        %1016 = vmatpush.msra.mxu0 %v816
        %1017 = vmatmul.f32.gmra.mxu0 %v775
        %v1018 = vpop.f32.mrf.mxu0
        %v1019 = vadd.f32 %v990, %v1018
        %1020 = vmatmul.f32.gmra.mxu0 %v776
        %v1021 = vpop.f32.mrf.mxu0
        %v1022 = vadd.f32 %v993, %v1021
        %1023 = vmatmul.f32.gmra.mxu0 %v777
        %v1024 = vpop.f32.mrf.mxu0
        %v1025 = vadd.f32 %v996, %v1024
        %1026 = vmatmul.f32.gmra.mxu0 %v778
        %v1027 = vpop.f32.mrf.mxu0
        %v1028 = vadd.f32 %v999, %v1027
        %1029 = vdwg.mxu0
        %1030 = vmatpush.msra.mxu0 %v878
        %1031 = vmatpush.msra.mxu0 %v876
        %1032 = vmatpush.msra.mxu0 %v874
        %1033 = vmatpush.msra.mxu0 %v872
        %1034 = vmatpush.msra.mxu0 %v870
        %1035 = vmatpush.msra.mxu0 %v868
        %1036 = vmatpush.msra.mxu0 %v866
        %1037 = vmatpush.msra.mxu0 %v864
        %1038 = vmatpush.msra.mxu0 %v862
        %1039 = vmatpush.msra.mxu0 %v860
        %1040 = vmatpush.msra.mxu0 %v858
        %1041 = vmatpush.msra.mxu0 %v856
        %1042 = vmatpush.msra.mxu0 %v854
        %1043 = vmatpush.msra.mxu0 %v852
        %1044 = vmatpush.msra.mxu0 %v850
        %1045 = vmatpush.msra.mxu0 %v848
        %1046 = vmatmul.f32.gmra.mxu0 %v779
        %v1047 = vpop.f32.mrf.mxu0
        %v1048 = vadd.f32 %v1019, %v1047
        %1049 = vmatmul.f32.gmra.mxu0 %v780
        %v1050 = vpop.f32.mrf.mxu0
        %v1051 = vadd.f32 %v1022, %v1050
        %1052 = vmatmul.f32.gmra.mxu0 %v781
        %v1053 = vpop.f32.mrf.mxu0
        %v1054 = vadd.f32 %v1025, %v1053
        %1055 = vmatmul.f32.gmra.mxu0 %v782
        %v1056 = vpop.f32.mrf.mxu0
        %v1057 = vadd.f32 %v1028, %v1056
        %1058 = vdwg.mxu0
        %v1059 = vtanh.pop %v961
        %v1060 = vtanh.pop %v964
        %v1061 = vtanh.pop %v967
        %v1062 = vtanh.pop %v970
        %v1063 = vxor.u32 %v1048, 2147483648
        %v1064 = vxor.u32 %v1051, 2147483648
        %v1065 = vxor.u32 %v1054, 2147483648
        %v1066 = vxor.u32 %v1057, 2147483648
        %v1067 = vmul.f32 %v1063, 1.442695
        %v1068 = vpow.pop %v1067
        %v1069 = vmul.f32 %v1064, 1.442695
        %v1070 = vpow.pop %v1069
        %v1071 = vmul.f32 %v1065, 1.442695
        %v1072 = vpow.pop %v1071
        %v1073 = vmul.f32 %v1066, 1.442695
        %v1074 = vpow.pop %v1073
        %v1075 = vadd.f32 %v1068, 1.0
        %v1076 = vadd.f32 %v1070, 1.0
        %v1077 = vadd.f32 %v1072, 1.0
        %v1078 = vadd.f32 %v1074, 1.0
        %v1079 = vrcp.pop %v1075
        %v1080 = vmul.f32 %v1075, %v1079
        %v1081 = vsub.f32 1.0, %v1080
        %v1082 = vmul.f32 %v1079, %v1081
        %v1083 = vadd.f32 %v1079, %v1082
        %vm1084 = vweird.f32 %v1075
        %vm1085 = vweird.f32 %v1079
        %vm1086 = vmor %vm1084, %vm1085
        %v1087 = vsel %vm1086, %v1079, %v1083
        %v1088 = vand.u32 2147483647, %v1075
        %vm1089 = vcmp.eq.f32.partialorder %v1088, 8.507059e+37
        %v1090 = vand.u32 %v1075, 2147483648
        %v1091 = vor.u32 1.1754944e-38, %v1090
        %v1092 = vsel %vm1089, %v1091, %v1087
        %v1093 = vmul.f32 1.0, %v1092
        %v1094 = vrcp.pop %v1076
        %v1095 = vmul.f32 %v1076, %v1094
        %v1096 = vsub.f32 1.0, %v1095
        %v1097 = vmul.f32 %v1094, %v1096
        %v1098 = vadd.f32 %v1094, %v1097
        %vm1099 = vweird.f32 %v1076
        %vm1100 = vweird.f32 %v1094
        %vm1101 = vmor %vm1099, %vm1100
        %v1102 = vsel %vm1101, %v1094, %v1098
        %v1103 = vand.u32 2147483647, %v1076
        %vm1104 = vcmp.eq.f32.partialorder %v1103, 8.507059e+37
        %v1105 = vand.u32 %v1076, 2147483648
        %v1106 = vor.u32 1.1754944e-38, %v1105
        %v1107 = vsel %vm1104, %v1106, %v1102
        %v1108 = vmul.f32 1.0, %v1107
        %v1109 = vrcp.pop %v1077
        %v1110 = vmul.f32 %v1077, %v1109
        %v1111 = vsub.f32 1.0, %v1110
        %v1112 = vmul.f32 %v1109, %v1111
        %v1113 = vadd.f32 %v1109, %v1112
        %vm1114 = vweird.f32 %v1077
        %vm1115 = vweird.f32 %v1109
        %vm1116 = vmor %vm1114, %vm1115
        %v1117 = vsel %vm1116, %v1109, %v1113
        %v1118 = vand.u32 2147483647, %v1077
        %vm1119 = vcmp.eq.f32.partialorder %v1118, 8.507059e+37
        %v1120 = vand.u32 %v1077, 2147483648
        %v1121 = vor.u32 1.1754944e-38, %v1120
        %v1122 = vsel %vm1119, %v1121, %v1117
        %v1123 = vmul.f32 1.0, %v1122
        %v1124 = vrcp.pop %v1078
        %v1125 = vmul.f32 %v1078, %v1124
        %v1126 = vsub.f32 1.0, %v1125
        %v1127 = vmul.f32 %v1124, %v1126
        %v1128 = vadd.f32 %v1124, %v1127
        %vm1129 = vweird.f32 %v1078
        %vm1130 = vweird.f32 %v1124
        %vm1131 = vmor %vm1129, %vm1130
        %v1132 = vsel %vm1131, %v1124, %v1128
        %v1133 = vand.u32 2147483647, %v1078
        %vm1134 = vcmp.eq.f32.partialorder %v1133, 8.507059e+37
        %v1135 = vand.u32 %v1078, 2147483648
        %v1136 = vor.u32 1.1754944e-38, %v1135
        %v1137 = vsel %vm1134, %v1136, %v1132
        %v1138 = vmul.f32 1.0, %v1137
        %v1139 = vmul.f32 %v1059, %v1093
        %v1140 = vmul.f32 %v1060, %v1108
        %v1141 = vmul.f32 %v1061, %v1123
        %v1142 = vmul.f32 %v1062, %v1138
        %v1143 = vld [vmem:[%s598] sm:$0xff]
        %v1144 = vld [vmem:[%s598 + $0x8] sm:$0xff]
        %v1145 = vld [vmem:[%s598 + $0x10] sm:$0xff]
        %v1146 = vld [vmem:[%s598 + $0x18] sm:$0xff]
        %v1147 = vld [vmem:[%s598 + $0x20] sm:$0xff]
        %v1148 = vld [vmem:[%s598 + $0x28] sm:$0xff]
        %v1149 = vld [vmem:[%s598 + $0x30] sm:$0xff]
        %v1150 = vld [vmem:[%s598 + $0x38] sm:$0xff]
        %v1151 = vld [vmem:[%s598 + $0x40] sm:$0xff]
        %v1152 = vld [vmem:[%s598 + $0x48] sm:$0xff]
        %v1153 = vld [vmem:[%s598 + $0x50] sm:$0xff]
        %v1154 = vld [vmem:[%s598 + $0x58] sm:$0xff]
        %v1155 = vld [vmem:[%s598 + $0x60] sm:$0xff]
        %v1156 = vld [vmem:[%s598 + $0x68] sm:$0xff]
        %v1157 = vld [vmem:[%s598 + $0x70] sm:$0xff]
        %v1158 = vld [vmem:[%s598 + $0x78] sm:$0xff]
        %v1159 = vld [vmem:[%s607] sm:$0x1]
        %v1161 = vperm.slane %v1159, 0
        %1163 = vmatpush.msra.mxu0 %v1158
        %1164 = vmatpush.msra.mxu0 %v1157
        %1165 = vmatpush.msra.mxu0 %v1156
        %1166 = vmatpush.msra.mxu0 %v1155
        %1167 = vmatpush.msra.mxu0 %v1154
        %1168 = vmatpush.msra.mxu0 %v1153
        %1169 = vmatpush.msra.mxu0 %v1152
        %1170 = vmatpush.msra.mxu0 %v1151
        %1171 = vmatpush.msra.mxu0 %v1150
        %1172 = vmatpush.msra.mxu0 %v1149
        %1173 = vmatpush.msra.mxu0 %v1148
        %1174 = vmatpush.msra.mxu0 %v1147
        %1175 = vmatpush.msra.mxu0 %v1146
        %1176 = vmatpush.msra.mxu0 %v1145
        %1177 = vmatpush.msra.mxu0 %v1144
        %1178 = vmatpush.msra.mxu0 %v1143
        %1179 = vmatmul.f32.gmra.mxu0 %v1139
        %v1180 = vpop.f32.mrf.mxu0
        %v1181 = vadd.f32 %v1161, %v1180
        %1182 = vmatmul.f32.gmra.mxu0 %v1140
        %v1183 = vpop.f32.mrf.mxu0
        %v1184 = vadd.f32 %v1161, %v1183
        %1185 = vmatmul.f32.gmra.mxu0 %v1141
        %v1186 = vpop.f32.mrf.mxu0
        %v1187 = vadd.f32 %v1161, %v1186
        %1188 = vmatmul.f32.gmra.mxu0 %v1142
        %v1189 = vpop.f32.mrf.mxu0
        %v1190 = vadd.f32 %v1161, %v1189
        %1191 = vdwg.mxu0
        %v1192 = vadd.f32 %v1181, %v760
        %v1193 = vadd.f32 %v1184, %v761
        %v1194 = vadd.f32 %v1187, %v762
        %v1195 = vadd.f32 %v1190, %v763
        %v1196 = vmul.f32 %v1192, 0.70710677
        %v1197 = vmul.f32 %v1193, 0.70710677
        %v1198 = vmul.f32 %v1194, 0.70710677
        %v1199 = vmul.f32 %v1195, 0.70710677
        %1200 = vst [vmem:[#allocation3 + $0x8] sm:$0xff] %v1196
        %1201 = vst [vmem:[#allocation3 + $0x10] sm:$0xff] %v1197
        %1202 = vst [vmem:[#allocation3 + $0x18] sm:$0xff] %v1198
        %1203 = vst [vmem:[#allocation3 + $0x20] sm:$0xff] %v1199
        // Predicated region
        $region117: #{tpu_custom_call.1} parent=63 // pred_check
          %p1204 = pneg %p688
        $region118: #{tpu_custom_call.1} parent=63 // pred_check_branch
          %1206 = sbr.rel (%p1204) target = $region120
        $region119: #{tpu_custom_call.1} parent=63 // pred_region
          %1207 = vst [vmem:[#allocation4] sm:$0xff] %v1196
          %1208 = vst [vmem:[#allocation4 + $0x8] sm:$0xff] %v1197
          %1209 = vst [vmem:[#allocation4 + $0x10] sm:$0xff] %v1198
          %1210 = vst [vmem:[#allocation4 + $0x18] sm:$0xff] %v1199
        $region120: #{tpu_custom_call.1} parent=63 // pred_fallthru
          _
        %p1211 = scmp.gt.s32.totalorder %s53, 0
        // Predicated region
        $region121: #{tpu_custom_call.1} parent=63 // pred_check
          %p1212 = pneg %p1211
        $region122: #{tpu_custom_call.1} parent=63 // pred_check_branch
          %1214 = sbr.rel (%p1212) target = $region124
        $region123: #{tpu_custom_call.1} parent=63 // pred_region
          %v1215 = vld [vmem:[#allocation4] sm:$0xff]
          %v1216 = vld [vmem:[#allocation4 + $0x8] sm:$0xff]
          %v1217 = vld [vmem:[#allocation4 + $0x10] sm:$0xff]
          %v1218 = vld [vmem:[#allocation4 + $0x18] sm:$0xff]
          %v1219 = vadd.f32 %v1215, %v1196
          %v1220 = vadd.f32 %v1216, %v1197
          %v1221 = vadd.f32 %v1217, %v1198
          %v1222 = vadd.f32 %v1218, %v1199
          %v1223 = vmul.f32 %v1219, 0.70710677
          %v1224 = vmul.f32 %v1220, 0.70710677
          %v1225 = vmul.f32 %v1221, 0.70710677
          %v1226 = vmul.f32 %v1222, 0.70710677
          %1227 = vst [vmem:[#allocation4] sm:$0xff] %v1223
          %1228 = vst [vmem:[#allocation4 + $0x8] sm:$0xff] %v1224
          %1229 = vst [vmem:[#allocation4 + $0x10] sm:$0xff] %v1225
          %1230 = vst [vmem:[#allocation4 + $0x18] sm:$0xff] %v1226
        $region124: #{tpu_custom_call.1} parent=63 // pred_fallthru
          _
        %p1231 = scmp.eq.s32.totalorder %s53, 3
        // Predicated region
        $region125: #{tpu_custom_call.1} parent=63 // pred_check
          %p1232 = pneg %p1231
        $region126: #{tpu_custom_call.1} parent=63 // pred_check_branch
          %1234 = sbr.rel (%p1232) target = $region128
        $region127: #{tpu_custom_call.1} parent=63 // pred_region
          %v1235 = vld [vmem:[#allocation4] sm:$0xff]
          %v1236 = vld [vmem:[#allocation4 + $0x8] sm:$0xff]
          %v1237 = vld [vmem:[#allocation4 + $0x10] sm:$0xff]
          %v1238 = vld [vmem:[#allocation4 + $0x18] sm:$0xff]
          %v1239 = vmax.f32 %v1235, 0.0
          %v1240 = vmax.f32 %v1236, 0.0
          %v1241 = vmax.f32 %v1237, 0.0
          %v1242 = vmax.f32 %v1238, 0.0
          %v1243 = vld [vmem:[#allocation19] sm:$0xff]
          %v1244 = vld [vmem:[#allocation19 + $0x8] sm:$0xff]
          %v1245 = vld [vmem:[#allocation19 + $0x10] sm:$0xff]
          %v1246 = vld [vmem:[#allocation19 + $0x18] sm:$0xff]
          %v1247 = vld [vmem:[#allocation19 + $0x20] sm:$0xff]
          %v1248 = vld [vmem:[#allocation19 + $0x28] sm:$0xff]
          %v1249 = vld [vmem:[#allocation19 + $0x30] sm:$0xff]
          %v1250 = vld [vmem:[#allocation19 + $0x38] sm:$0xff]
          %v1251 = vld [vmem:[#allocation19 + $0x40] sm:$0xff]
          %v1252 = vld [vmem:[#allocation19 + $0x48] sm:$0xff]
          %v1253 = vld [vmem:[#allocation19 + $0x50] sm:$0xff]
          %v1254 = vld [vmem:[#allocation19 + $0x58] sm:$0xff]
          %v1255 = vld [vmem:[#allocation19 + $0x60] sm:$0xff]
          %v1256 = vld [vmem:[#allocation19 + $0x68] sm:$0xff]
          %v1257 = vld [vmem:[#allocation19 + $0x70] sm:$0xff]
          %v1258 = vld [vmem:[#allocation19 + $0x78] sm:$0xff]
          %v1259 = vld [vmem:[#allocation21] sm:$0x1]
          %v1261 = vperm.slane %v1259, 0
          %1263 = vmatpush.msra.mxu0 %v1258
          %1264 = vmatpush.msra.mxu0 %v1257
          %1265 = vmatpush.msra.mxu0 %v1256
          %1266 = vmatpush.msra.mxu0 %v1255
          %1267 = vmatpush.msra.mxu0 %v1254
          %1268 = vmatpush.msra.mxu0 %v1253
          %1269 = vmatpush.msra.mxu0 %v1252
          %1270 = vmatpush.msra.mxu0 %v1251
          %1271 = vmatpush.msra.mxu0 %v1250
          %1272 = vmatpush.msra.mxu0 %v1249
          %1273 = vmatpush.msra.mxu0 %v1248
          %1274 = vmatpush.msra.mxu0 %v1247
          %1275 = vmatpush.msra.mxu0 %v1246
          %1276 = vmatpush.msra.mxu0 %v1245
          %1277 = vmatpush.msra.mxu0 %v1244
          %1278 = vmatpush.msra.mxu0 %v1243
          %1279 = vmatmul.f32.gmra.mxu0 %v1239
          %v1280 = vpop.f32.mrf.mxu0
          %v1281 = vadd.f32 %v1261, %v1280
          %1282 = vmatmul.f32.gmra.mxu0 %v1240
          %v1283 = vpop.f32.mrf.mxu0
          %v1284 = vadd.f32 %v1261, %v1283
          %1285 = vmatmul.f32.gmra.mxu0 %v1241
          %v1286 = vpop.f32.mrf.mxu0
          %v1287 = vadd.f32 %v1261, %v1286
          %1288 = vmatmul.f32.gmra.mxu0 %v1242
          %v1289 = vpop.f32.mrf.mxu0
          %v1290 = vadd.f32 %v1261, %v1289
          %1291 = vdwg.mxu0
          %v1292 = vmax.f32 %v1281, 0.0
          %v1293 = vmax.f32 %v1284, 0.0
          %v1294 = vmax.f32 %v1287, 0.0
          %v1295 = vmax.f32 %v1290, 0.0
          %v1296 = vld [vmem:[#allocation22] sm:$0xff]
          %v1297 = vld [vmem:[#allocation22 + $0x8] sm:$0xff]
          %v1298 = vld [vmem:[#allocation22 + $0x10] sm:$0xff]
          %v1299 = vld [vmem:[#allocation22 + $0x18] sm:$0xff]
          %v1300 = vld [vmem:[#allocation22 + $0x20] sm:$0xff]
          %v1301 = vld [vmem:[#allocation22 + $0x28] sm:$0xff]
          %v1302 = vld [vmem:[#allocation22 + $0x30] sm:$0xff]
          %v1303 = vld [vmem:[#allocation22 + $0x38] sm:$0xff]
          %v1304 = vld [vmem:[#allocation22 + $0x40] sm:$0xff]
          %v1305 = vld [vmem:[#allocation22 + $0x48] sm:$0xff]
          %v1306 = vld [vmem:[#allocation22 + $0x50] sm:$0xff]
          %v1307 = vld [vmem:[#allocation22 + $0x58] sm:$0xff]
          %v1308 = vld [vmem:[#allocation22 + $0x60] sm:$0xff]
          %v1309 = vld [vmem:[#allocation22 + $0x68] sm:$0xff]
          %v1310 = vld [vmem:[#allocation22 + $0x70] sm:$0xff]
          %v1311 = vld [vmem:[#allocation22 + $0x78] sm:$0xff]
          %v1312 = vld [vmem:[#allocation24] sm:$0x1]
          %v1314 = vperm.slane %v1312, 0
          %1316 = vmatpush.msra.mxu0 %v1311
          %1317 = vmatpush.msra.mxu0 %v1310
          %1318 = vmatpush.msra.mxu0 %v1309
          %1319 = vmatpush.msra.mxu0 %v1308
          %1320 = vmatpush.msra.mxu0 %v1307
          %1321 = vmatpush.msra.mxu0 %v1306
          %1322 = vmatpush.msra.mxu0 %v1305
          %1323 = vmatpush.msra.mxu0 %v1304
          %1324 = vmatpush.msra.mxu0 %v1303
          %1325 = vmatpush.msra.mxu0 %v1302
          %1326 = vmatpush.msra.mxu0 %v1301
          %1327 = vmatpush.msra.mxu0 %v1300
          %1328 = vmatpush.msra.mxu0 %v1299
          %1329 = vmatpush.msra.mxu0 %v1298
          %1330 = vmatpush.msra.mxu0 %v1297
          %1331 = vmatpush.msra.mxu0 %v1296
          %1332 = vmatmul.f32.gmra.mxu0 %v1292
          %v1333 = vpop.f32.mrf.mxu0
          %v1334 = vadd.f32 %v1314, %v1333
          %1335 = vmatmul.f32.gmra.mxu0 %v1293
          %v1336 = vpop.f32.mrf.mxu0
          %v1337 = vadd.f32 %v1314, %v1336
          %1338 = vmatmul.f32.gmra.mxu0 %v1294
          %v1339 = vpop.f32.mrf.mxu0
          %v1340 = vadd.f32 %v1314, %v1339
          %1341 = vmatmul.f32.gmra.mxu0 %v1295
          %v1342 = vpop.f32.mrf.mxu0
          %v1343 = vadd.f32 %v1314, %v1342
          %1344 = vdwg.mxu0
          %1345 = vst [vmem:[%s685] sm:$0xff] %v1334
          %1346 = vst [vmem:[%s685 + $0x8] sm:$0xff] %v1337
          %1347 = vst [vmem:[%s685 + $0x10] sm:$0xff] %v1340
          %1348 = vst [vmem:[%s685 + $0x18] sm:$0xff] %v1343
        $region128: #{tpu_custom_call.1} parent=63 // pred_fallthru
          _
        %s1349 = sand.u32 %s333, 1
        %s1350 = scalar_lea.sflag [#allocation9], %s1349
        %s1351 = sand.u32 %s333, 1
        %s1352 = smul.addr %s1351, 32
        %s1353 = scalar_lea.vmem [#allocation25], %s1352
        // Predicated region
        $region129: #{tpu_custom_call.1} parent=63 // pred_check
          %p1354 = pneg %p343
        $region130: #{tpu_custom_call.1} parent=63 // pred_check_branch
          %1356 = sbr.rel (%p1354) target = $region132
        $region131: #{tpu_custom_call.1} parent=63 // pred_region
          %s1357 = smul.u32 4, %s52
          %1359 = vsyncadd %s1350, 0
          %s1360 = smul.addr %s51, 8
          %s1361 = sadd.s32 %s1357, %s1360
          %s1362 = smul.addr %s1361, 8
          %s1363 = scalar_lea.hbm %s12, %s1362
          %s1364 = sshll.u32 %s1353, 4
          %s1365 = int_to_ptr.vmem [resolvable:$true] %s1364
          %s1366 = sshll.u32 %s1363, 4
          %s1367 = int_to_ptr.hbm [resolvable:$true] %s1366
          %1372 = dma.vmem_to_hbm [thread:$0]  %s1365, 512, %s1367, %s1350, 128, 128, 8
        $region132: #{tpu_custom_call.1} parent=63 // pred_fallthru
          _
      $region64: #{tpu_custom_call.1} parent=5 // pred_fallthru
        _
      %p1373 = scmp.le.s32.totalorder 2, %s41
      // Predicated region
      $region133: #{tpu_custom_call.1} parent=5 // pred_check
        %p1374 = pneg %p1373
      $region134: #{tpu_custom_call.1} parent=5 // pred_check_branch
        %1376 = sbr.rel (%p1374) target = $region136
      $region135: #{tpu_custom_call.1} parent=5 // pred_region
        %s1377 = ssub.s32 %s41, 2
        // Predicated region
        $region137: #{tpu_custom_call.1} parent=135 // pred_check
          %p1378 = pneg %p349
        $region138: #{tpu_custom_call.1} parent=135 // pred_check_branch
          %1380 = sbr.rel (%p1378) target = $region140
        $region139: #{tpu_custom_call.1} parent=135 // pred_region
          %s1381 = sand.u32 %s334, 1
          %s1382 = scalar_lea.sflag [#allocation9], %s1381
          %s1383 = sand.u32 %s334, 1
          %s1384 = smul.addr %s1383, 32
          %s1385 = scalar_lea.vmem [#allocation25], %s1384
          %1387 = dma.done %s1382, 512
        $region140: #{tpu_custom_call.1} parent=135 // pred_fallthru
          _
      $region136: #{tpu_custom_call.1} parent=5 // pred_fallthru
        _
    $region6: #{tpu_custom_call.1} parent=1 // loop_footer
      %s45 = sadd.s32 1, %s41
    $region7: #{tpu_custom_call.1} parent=1 // loop_footer_branch
      %40 = sbr.rel target = $region3
    $region8: #{tpu_custom_call.1} parent=1 // loop_exit
      _
    %1388 = vsyncpa [#allocation8], 1
    %s1389 = scalar_lea.sflag [#allocation8], 1
    %1390 = vsyncpa %s1389, 1
    %1391 = vsyncpa [#allocation11], 1
    %1392 = vsyncpa [#allocation14], 1
    %s1393 = scalar_lea.sflag [#allocation14], 1
    %1394 = vsyncpa %s1393, 1
    %1395 = vsyncpa [#allocation17], 1
    %s1396 = scalar_lea.sflag [#allocation17], 1
    %1397 = vsyncpa %s1396, 1
    %1398 = vsyncpa [#allocation20], 1
    %1399 = vsyncpa [#allocation23], 1
    %1400 = vsyncpa [#allocation9], 1
    %s1401 = scalar_lea.sflag [#allocation9], 1
    %1402 = vsyncpa %s1401, 1

</llo_original>
